<compile_context>
chip_gen: v7x
topology: tpu7x:2x2x1
jax: 0.10.0
libtpu: 0.0.40
codegen_flags: <defaults>
</compile_context>

<pallas_src>
import jax
import jax.numpy as jnp
from jax.experimental import pallas as pl
from jax.experimental.pallas import tpu as pltpu

NUM_STEPS = 10
STEP_SIZE = 0.1
DECAY = 0.1


def _round_up(v, m):
    return ((v + m - 1) // m) * m


def solpred_gradproj_kernel(p_ref, x_ref, A_ref, At_ref, G_ref,
                            w1pT_ref, w1xT_ref, mgT_ref, b1_ref,
                            w2T_ref, b2_ref, o_ref):
    # All operands arrive in batch-on-lanes layout: (features, B_tile).
    P = p_ref[...]                     # (n_c, Bt)
    X = x_ref[...]                     # (n_x, Bt)
    A = A_ref[...]                     # (n_c, n_x)
    n_c = A.shape[0]

    # --- violation mask at the initial solution (feeds the MLP) ---
    r0 = jnp.dot(A, X, preferred_element_type=jnp.float32) - P          # (n_c, Bt)
    m0 = jnp.where(r0 > 0.0, 1.0, 0.0)                                  # (n_c, Bt)

    # --- h = layers(concat([p, x, g0], -1)); concat avoided via split matmuls.
    #     The g0 branch is pre-folded in the wrapper: mgT = ((A @ W1g)/n_c)^T,
    #     so W1g^T @ g0^T == mgT @ m0 and g0 never needs to be materialised.
    h1 = (jnp.dot(w1pT_ref[...], P, preferred_element_type=jnp.float32)
          + jnp.dot(w1xT_ref[...], X, preferred_element_type=jnp.float32)
          + jnp.dot(mgT_ref[...], m0, preferred_element_type=jnp.float32)
          + b1_ref[...])                                                # (H, Bt)
    h1 = jnp.maximum(h1, 0.0)
    h = jnp.dot(w2T_ref[...], h1, preferred_element_type=jnp.float32) + b2_ref[...]

    # residual re-prediction:  x <- x + h
    X = X + h

    # --- gradient projection steps (gradProj), Gram-matrix recurrence.
    #     r_{i+1} = r_i - G @ m_i   (exactly A@x_{i+1} - p in exact arithmetic),
    #     x_final = x - A^T @ sum_i m_i ; step scale and 1/n_c folded into m_i.
    G = G_ref[...]                                                      # (n_c, n_c)
    r = jnp.dot(A, X, preferred_element_type=jnp.float32) - P           # (n_c, Bt)
    m_acc = jnp.zeros_like(r)
    for i in range(NUM_STEPS):
        scale = STEP_SIZE * (DECAY ** i) / n_c
        m = jnp.where(r > 0.0, jnp.float32(scale), 0.0)
        m_acc = m_acc + m
        if i + 1 < NUM_STEPS:          # last residual update is never consumed
            r = r - jnp.dot(G, m, preferred_element_type=jnp.float32)

    o_ref[...] = X - jnp.dot(At_ref[...], m_acc,
                             preferred_element_type=jnp.float32)


def solpred_gradproj(p, x, A, W1, b1, W2, b2, *, batch_tile=512):
    B, n_x = x.shape
    n_c = A.shape[0]
    H = W1.shape[1]

    # ---- constant folding / transposition, done once in plain JAX ----
    A = A.astype(jnp.float32)
    A_t = A.T                                                  # (n_x, n_c)
    G = (A @ A.T).astype(jnp.float32)                          # (n_c, n_c) Gram
    w1pT = W1[:n_c].T.astype(jnp.float32)                      # (H, n_c)
    w1xT = W1[n_c:n_c + n_x].T.astype(jnp.float32)             # (H, n_x)
    mgT = ((A @ W1[n_c + n_x:]) / n_c).T.astype(jnp.float32)   # (H, n_c)
    b1c = b1.reshape(H, 1).astype(jnp.float32)
    W2T = W2.T.astype(jnp.float32)                             # (n_x, H)
    b2c = b2.reshape(n_x, 1).astype(jnp.float32)

    # ---- batch-on-lanes layout, padded to a multiple of the lane tile ----
    bt = min(batch_tile, _round_up(B, 128))
    B_pad = _round_up(B, bt)
    pT = jnp.pad(p.T.astype(jnp.float32), ((0, 0), (0, B_pad - B)))
    xT = jnp.pad(x.T.astype(jnp.float32), ((0, 0), (0, B_pad - B)))
    # Padded columns compute garbage independently per-column and are sliced off.

    grid = (B_pad // bt,)

    def tiled(rows):          # batch-tiled operand: lane axis follows the grid
        return pl.BlockSpec((rows, bt), lambda i: (0, i))

    def resident(arr):        # weights: one full block, resident across the grid
        return pl.BlockSpec(arr.shape, lambda i: (0, 0))

    outT = pl.pallas_call(
        solpred_gradproj_kernel,
        grid=grid,
        out_shape=jax.ShapeDtypeStruct((n_x, B_pad), jnp.float32),
        in_specs=[
            tiled(n_c),          # p^T
            tiled(n_x),          # x^T
            resident(A),         # A
            resident(A_t),       # A^T
            resident(G),         # A @ A^T
            resident(w1pT),
            resident(w1xT),
            resident(mgT),
            resident(b1c),
            resident(W2T),
            resident(b2c),
        ],
        out_specs=tiled(n_x),
        compiler_params=pltpu.CompilerParams(
            dimension_semantics=("parallel",)),
    )(pT, xT, A, A_t, G, w1pT, w1xT, mgT, b1c, W2T, b2c)

    return outT[:, :B].T


def solpred_gradproj_ref(p, x, A, W1, b1, W2, b2):
    """Pure-JAX reference of the same forward (for correctness checking)."""
    n_c = A.shape[0]

    def vg(x):
        r = x @ A.T - p
        mask = (r > 0).astype(jnp.float32)
        return (mask @ A) / n_c

    g0 = vg(x)
    f = jnp.concatenate([p, x, g0], axis=-1)
    h = jnp.maximum(f @ W1 + b1, 0.0) @ W2 + b2
    x = x + h
    for i in range(NUM_STEPS):
        x = x - (STEP_SIZE * (DECAY ** i)) * vg(x)
    return x


if __name__ == "__main__":
    B, n_x, n_c, H = 8, 32, 16, 64
    key = jax.random.PRNGKey(0)
    k_p, k_x, k_A, k_W1, k_b1, k_W2, k_b2 = jax.random.split(key, 7)

    p = jax.random.normal(k_p, (B, n_c), dtype=jnp.float32)          # parameters
    x = jax.random.normal(k_x, (B, n_x), dtype=jnp.float32)          # initial solution
    A = jax.random.normal(k_A, (n_c, n_x), dtype=jnp.float32) * 0.3  # constraint matrix

    # deterministic "trained" MLP weights (layers): Linear(80,64)->ReLU->Linear(64,32)
    W1 = jax.random.normal(k_W1, (n_c + 2 * n_x, H), dtype=jnp.float32) * 0.05
    b1 = jax.random.normal(k_b1, (H,), dtype=jnp.float32) * 0.05
    W2 = jax.random.normal(k_W2, (H, n_x), dtype=jnp.float32) * 0.05
    b2 = jax.random.normal(k_b2, (n_x,), dtype=jnp.float32) * 0.05

    out = jax.block_until_ready(solpred_gradproj(p, x, A, W1, b1, W2, b2))
    ref = solpred_gradproj_ref(p, x, A, W1, b1, W2, b2)
    assert out.shape == (B, n_x)
    assert jnp.allclose(out, ref, atol=1e-4, rtol=1e-4)

    # TODO(synk): `gradProj` internals and the constraint objects are not shown in the
    # source file; the standard decayed-step gradient projection on relu(A@x - p) is assumed.
    print("KERNEL_OK")
</pallas_src>

<mosaic_0001>
module attributes {stable_mosaic.version = 11 : i64} {
  func.func @solpred_gradproj_kernel(%arg0: i32, %arg1: memref<16x128xf32, #tpu.memory_space<vmem>>, %arg2: memref<32x128xf32, #tpu.memory_space<vmem>>, %arg3: memref<16x32xf32, #tpu.memory_space<vmem>>, %arg4: memref<32x16xf32, #tpu.memory_space<vmem>>, %arg5: memref<16x16xf32, #tpu.memory_space<vmem>>, %arg6: memref<64x16xf32, #tpu.memory_space<vmem>>, %arg7: memref<64x32xf32, #tpu.memory_space<vmem>>, %arg8: memref<64x16xf32, #tpu.memory_space<vmem>>, %arg9: memref<64x1xf32, #tpu.memory_space<vmem>>, %arg10: memref<32x64xf32, #tpu.memory_space<vmem>>, %arg11: memref<32x1xf32, #tpu.memory_space<vmem>>, %arg12: memref<32x128xf32, #tpu.memory_space<vmem>>) attributes {dimension_semantics = [#tpu.dimension_semantics<parallel>], iteration_bounds = array<i64: 1>, scalar_prefetch = 0 : i64, scratch_operands = 0 : i64, tpu.core_type = #tpu.core_type<tc>, window_params = [{transform_indices = @transform_0, window_bounds = array<i64: 16, 128>}, {transform_indices = @transform_1, window_bounds = array<i64: 32, 128>}, {pipeline_mode = #tpu.pipeline_mode<synchronous>, transform_indices = @transform_2, window_bounds = array<i64: 16, 32>}, {pipeline_mode = #tpu.pipeline_mode<synchronous>, transform_indices = @transform_3, window_bounds = array<i64: 32, 16>}, {pipeline_mode = #tpu.pipeline_mode<synchronous>, transform_indices = @transform_4, window_bounds = array<i64: 16, 16>}, {pipeline_mode = #tpu.pipeline_mode<synchronous>, transform_indices = @transform_5, window_bounds = array<i64: 64, 16>}, {pipeline_mode = #tpu.pipeline_mode<synchronous>, transform_indices = @transform_6, window_bounds = array<i64: 64, 32>}, {pipeline_mode = #tpu.pipeline_mode<synchronous>, transform_indices = @transform_7, window_bounds = array<i64: 64, 16>}, {pipeline_mode = #tpu.pipeline_mode<synchronous>, transform_indices = @transform_8, window_bounds = array<i64: 64, 1>}, {pipeline_mode = #tpu.pipeline_mode<synchronous>, transform_indices = @transform_9, window_bounds = array<i64: 32, 64>}, {pipeline_mode = #tpu.pipeline_mode<synchronous>, transform_indices = @transform_10, window_bounds = array<i64: 32, 1>}, {transform_indices = @transform_11, window_bounds = array<i64: 32, 128>}]} {
    %c0 = arith.constant 0 : index
    %c0_0 = arith.constant 0 : index
    %0 = vector.load %arg1[%c0, %c0_0] : memref<16x128xf32, #tpu.memory_space<vmem>>, vector<16x128xf32>
    %c0_1 = arith.constant 0 : index
    %c0_2 = arith.constant 0 : index
    %1 = vector.load %arg2[%c0_1, %c0_2] : memref<32x128xf32, #tpu.memory_space<vmem>>, vector<32x128xf32>
    %c0_3 = arith.constant 0 : index
    %c0_4 = arith.constant 0 : index
    %2 = vector.load %arg3[%c0_3, %c0_4] : memref<16x32xf32, #tpu.memory_space<vmem>>, vector<16x32xf32>
    %cst = arith.constant dense<0.000000e+00> : vector<16x128xf32>
    %3 = tpu.matmul %2, %1, %cst {dimension_numbers = #tpu.dot_dimension_numbers<[1], [0], [0], [1], [0, 0, 1, 1], [], []>} : vector<16x32xf32>, vector<32x128xf32>, vector<16x128xf32> -> vector<16x128xf32>
    %4 = arith.subf %3, %0 : vector<16x128xf32>
    %cst_5 = arith.constant 0.000000e+00 : f32
    %5 = vector.broadcast %cst_5 : f32 to vector<16x128xf32>
    %6 = arith.cmpf ogt, %4, %5 : vector<16x128xf32>
    %cst_6 = arith.constant 1.000000e+00 : f32
    %cst_7 = arith.constant 0.000000e+00 : f32
    %7 = vector.broadcast %cst_6 : f32 to vector<16x128xf32>
    %8 = vector.broadcast %cst_7 : f32 to vector<16x128xf32>
    %9 = arith.select %6, %7, %8 : vector<16x128xi1>, vector<16x128xf32>
    %c0_8 = arith.constant 0 : index
    %c0_9 = arith.constant 0 : index
    %10 = vector.load %arg6[%c0_8, %c0_9] : memref<64x16xf32, #tpu.memory_space<vmem>>, vector<64x16xf32>
    %cst_10 = arith.constant dense<0.000000e+00> : vector<64x128xf32>
    %11 = tpu.matmul %10, %0, %cst_10 {dimension_numbers = #tpu.dot_dimension_numbers<[1], [0], [0], [1], [0, 0, 1, 1], [], []>} : vector<64x16xf32>, vector<16x128xf32>, vector<64x128xf32> -> vector<64x128xf32>
    %c0_11 = arith.constant 0 : index
    %c0_12 = arith.constant 0 : index
    %12 = vector.load %arg7[%c0_11, %c0_12] : memref<64x32xf32, #tpu.memory_space<vmem>>, vector<64x32xf32>
    %cst_13 = arith.constant dense<0.000000e+00> : vector<64x128xf32>
    %13 = tpu.matmul %12, %1, %cst_13 {dimension_numbers = #tpu.dot_dimension_numbers<[1], [0], [0], [1], [0, 0, 1, 1], [], []>} : vector<64x32xf32>, vector<32x128xf32>, vector<64x128xf32> -> vector<64x128xf32>
    %14 = arith.addf %11, %13 : vector<64x128xf32>
    %c0_14 = arith.constant 0 : index
    %c0_15 = arith.constant 0 : index
    %15 = vector.load %arg8[%c0_14, %c0_15] : memref<64x16xf32, #tpu.memory_space<vmem>>, vector<64x16xf32>
    %cst_16 = arith.constant dense<0.000000e+00> : vector<64x128xf32>
    %16 = tpu.matmul %15, %9, %cst_16 {dimension_numbers = #tpu.dot_dimension_numbers<[1], [0], [0], [1], [0, 0, 1, 1], [], []>} : vector<64x16xf32>, vector<16x128xf32>, vector<64x128xf32> -> vector<64x128xf32>
    %17 = arith.addf %14, %16 : vector<64x128xf32>
    %c0_17 = arith.constant 0 : index
    %c0_18 = arith.constant 0 : index
    %18 = vector.load %arg9[%c0_17, %c0_18] : memref<64x1xf32, #tpu.memory_space<vmem>>, vector<64x1xf32>
    %19 = vector.broadcast %18 : vector<64x1xf32> to vector<64x128xf32>
    %20 = arith.addf %17, %19 : vector<64x128xf32>
    %cst_19 = arith.constant 0.000000e+00 : f32
    %21 = vector.broadcast %cst_19 : f32 to vector<64x128xf32>
    %22 = arith.maximumf %20, %21 : vector<64x128xf32>
    %c0_20 = arith.constant 0 : index
    %c0_21 = arith.constant 0 : index
    %23 = vector.load %arg10[%c0_20, %c0_21] : memref<32x64xf32, #tpu.memory_space<vmem>>, vector<32x64xf32>
    %cst_22 = arith.constant dense<0.000000e+00> : vector<32x128xf32>
    %24 = tpu.matmul %23, %22, %cst_22 {dimension_numbers = #tpu.dot_dimension_numbers<[1], [0], [0], [1], [0, 0, 1, 1], [], []>} : vector<32x64xf32>, vector<64x128xf32>, vector<32x128xf32> -> vector<32x128xf32>
    %c0_23 = arith.constant 0 : index
    %c0_24 = arith.constant 0 : index
    %25 = vector.load %arg11[%c0_23, %c0_24] : memref<32x1xf32, #tpu.memory_space<vmem>>, vector<32x1xf32>
    %26 = vector.broadcast %25 : vector<32x1xf32> to vector<32x128xf32>
    %27 = arith.addf %24, %26 : vector<32x128xf32>
    %28 = arith.addf %1, %27 : vector<32x128xf32>
    %c0_25 = arith.constant 0 : index
    %c0_26 = arith.constant 0 : index
    %29 = vector.load %arg5[%c0_25, %c0_26] : memref<16x16xf32, #tpu.memory_space<vmem>>, vector<16x16xf32>
    %cst_27 = arith.constant dense<0.000000e+00> : vector<16x128xf32>
    %30 = tpu.matmul %2, %28, %cst_27 {dimension_numbers = #tpu.dot_dimension_numbers<[1], [0], [0], [1], [0, 0, 1, 1], [], []>} : vector<16x32xf32>, vector<32x128xf32>, vector<16x128xf32> -> vector<16x128xf32>
    %31 = arith.subf %30, %0 : vector<16x128xf32>
    %cst_28 = arith.constant 0.000000e+00 : f32
    %32 = vector.broadcast %cst_28 : f32 to vector<16x128xf32>
    %cst_29 = arith.constant 0.000000e+00 : f32
    %33 = vector.broadcast %cst_29 : f32 to vector<16x128xf32>
    %34 = arith.cmpf ogt, %31, %33 : vector<16x128xf32>
    %cst_30 = arith.constant 6.250000e-03 : f32
    %cst_31 = arith.constant 0.000000e+00 : f32
    %35 = vector.broadcast %cst_30 : f32 to vector<16x128xf32>
    %36 = vector.broadcast %cst_31 : f32 to vector<16x128xf32>
    %37 = arith.select %34, %35, %36 : vector<16x128xi1>, vector<16x128xf32>
    %38 = arith.addf %32, %37 : vector<16x128xf32>
    %cst_32 = arith.constant dense<0.000000e+00> : vector<16x128xf32>
    %39 = tpu.matmul %29, %37, %cst_32 {dimension_numbers = #tpu.dot_dimension_numbers<[1], [0], [0], [1], [0, 0, 1, 1], [], []>} : vector<16x16xf32>, vector<16x128xf32>, vector<16x128xf32> -> vector<16x128xf32>
    %40 = arith.subf %31, %39 : vector<16x128xf32>
    %cst_33 = arith.constant 0.000000e+00 : f32
    %41 = vector.broadcast %cst_33 : f32 to vector<16x128xf32>
    %42 = arith.cmpf ogt, %40, %41 : vector<16x128xf32>
    %cst_34 = arith.constant 6.250000e-04 : f32
    %cst_35 = arith.constant 0.000000e+00 : f32
    %43 = vector.broadcast %cst_34 : f32 to vector<16x128xf32>
    %44 = vector.broadcast %cst_35 : f32 to vector<16x128xf32>
    %45 = arith.select %42, %43, %44 : vector<16x128xi1>, vector<16x128xf32>
    %46 = arith.addf %38, %45 : vector<16x128xf32>
    %cst_36 = arith.constant dense<0.000000e+00> : vector<16x128xf32>
    %47 = tpu.matmul %29, %45, %cst_36 {dimension_numbers = #tpu.dot_dimension_numbers<[1], [0], [0], [1], [0, 0, 1, 1], [], []>} : vector<16x16xf32>, vector<16x128xf32>, vector<16x128xf32> -> vector<16x128xf32>
    %48 = arith.subf %40, %47 : vector<16x128xf32>
    %cst_37 = arith.constant 0.000000e+00 : f32
    %49 = vector.broadcast %cst_37 : f32 to vector<16x128xf32>
    %50 = arith.cmpf ogt, %48, %49 : vector<16x128xf32>
    %cst_38 = arith.constant 6.250000e-05 : f32
    %cst_39 = arith.constant 0.000000e+00 : f32
    %51 = vector.broadcast %cst_38 : f32 to vector<16x128xf32>
    %52 = vector.broadcast %cst_39 : f32 to vector<16x128xf32>
    %53 = arith.select %50, %51, %52 : vector<16x128xi1>, vector<16x128xf32>
    %54 = arith.addf %46, %53 : vector<16x128xf32>
    %cst_40 = arith.constant dense<0.000000e+00> : vector<16x128xf32>
    %55 = tpu.matmul %29, %53, %cst_40 {dimension_numbers = #tpu.dot_dimension_numbers<[1], [0], [0], [1], [0, 0, 1, 1], [], []>} : vector<16x16xf32>, vector<16x128xf32>, vector<16x128xf32> -> vector<16x128xf32>
    %56 = arith.subf %48, %55 : vector<16x128xf32>
    %cst_41 = arith.constant 0.000000e+00 : f32
    %57 = vector.broadcast %cst_41 : f32 to vector<16x128xf32>
    %58 = arith.cmpf ogt, %56, %57 : vector<16x128xf32>
    %cst_42 = arith.constant 6.250000e-06 : f32
    %cst_43 = arith.constant 0.000000e+00 : f32
    %59 = vector.broadcast %cst_42 : f32 to vector<16x128xf32>
    %60 = vector.broadcast %cst_43 : f32 to vector<16x128xf32>
    %61 = arith.select %58, %59, %60 : vector<16x128xi1>, vector<16x128xf32>
    %62 = arith.addf %54, %61 : vector<16x128xf32>
    %cst_44 = arith.constant dense<0.000000e+00> : vector<16x128xf32>
    %63 = tpu.matmul %29, %61, %cst_44 {dimension_numbers = #tpu.dot_dimension_numbers<[1], [0], [0], [1], [0, 0, 1, 1], [], []>} : vector<16x16xf32>, vector<16x128xf32>, vector<16x128xf32> -> vector<16x128xf32>
    %64 = arith.subf %56, %63 : vector<16x128xf32>
    %cst_45 = arith.constant 0.000000e+00 : f32
    %65 = vector.broadcast %cst_45 : f32 to vector<16x128xf32>
    %66 = arith.cmpf ogt, %64, %65 : vector<16x128xf32>
    %cst_46 = arith.constant 6.250000e-07 : f32
    %cst_47 = arith.constant 0.000000e+00 : f32
    %67 = vector.broadcast %cst_46 : f32 to vector<16x128xf32>
    %68 = vector.broadcast %cst_47 : f32 to vector<16x128xf32>
    %69 = arith.select %66, %67, %68 : vector<16x128xi1>, vector<16x128xf32>
    %70 = arith.addf %62, %69 : vector<16x128xf32>
    %cst_48 = arith.constant dense<0.000000e+00> : vector<16x128xf32>
    %71 = tpu.matmul %29, %69, %cst_48 {dimension_numbers = #tpu.dot_dimension_numbers<[1], [0], [0], [1], [0, 0, 1, 1], [], []>} : vector<16x16xf32>, vector<16x128xf32>, vector<16x128xf32> -> vector<16x128xf32>
    %72 = arith.subf %64, %71 : vector<16x128xf32>
    %cst_49 = arith.constant 0.000000e+00 : f32
    %73 = vector.broadcast %cst_49 : f32 to vector<16x128xf32>
    %74 = arith.cmpf ogt, %72, %73 : vector<16x128xf32>
    %cst_50 = arith.constant 6.24999998E-8 : f32
    %cst_51 = arith.constant 0.000000e+00 : f32
    %75 = vector.broadcast %cst_50 : f32 to vector<16x128xf32>
    %76 = vector.broadcast %cst_51 : f32 to vector<16x128xf32>
    %77 = arith.select %74, %75, %76 : vector<16x128xi1>, vector<16x128xf32>
    %78 = arith.addf %70, %77 : vector<16x128xf32>
    %cst_52 = arith.constant dense<0.000000e+00> : vector<16x128xf32>
    %79 = tpu.matmul %29, %77, %cst_52 {dimension_numbers = #tpu.dot_dimension_numbers<[1], [0], [0], [1], [0, 0, 1, 1], [], []>} : vector<16x16xf32>, vector<16x128xf32>, vector<16x128xf32> -> vector<16x128xf32>
    %80 = arith.subf %72, %79 : vector<16x128xf32>
    %cst_53 = arith.constant 0.000000e+00 : f32
    %81 = vector.broadcast %cst_53 : f32 to vector<16x128xf32>
    %82 = arith.cmpf ogt, %80, %81 : vector<16x128xf32>
    %cst_54 = arith.constant 6.250000e-09 : f32
    %cst_55 = arith.constant 0.000000e+00 : f32
    %83 = vector.broadcast %cst_54 : f32 to vector<16x128xf32>
    %84 = vector.broadcast %cst_55 : f32 to vector<16x128xf32>
    %85 = arith.select %82, %83, %84 : vector<16x128xi1>, vector<16x128xf32>
    %86 = arith.addf %78, %85 : vector<16x128xf32>
    %cst_56 = arith.constant dense<0.000000e+00> : vector<16x128xf32>
    %87 = tpu.matmul %29, %85, %cst_56 {dimension_numbers = #tpu.dot_dimension_numbers<[1], [0], [0], [1], [0, 0, 1, 1], [], []>} : vector<16x16xf32>, vector<16x128xf32>, vector<16x128xf32> -> vector<16x128xf32>
    %88 = arith.subf %80, %87 : vector<16x128xf32>
    %cst_57 = arith.constant 0.000000e+00 : f32
    %89 = vector.broadcast %cst_57 : f32 to vector<16x128xf32>
    %90 = arith.cmpf ogt, %88, %89 : vector<16x128xf32>
    %cst_58 = arith.constant 6.250000e-10 : f32
    %cst_59 = arith.constant 0.000000e+00 : f32
    %91 = vector.broadcast %cst_58 : f32 to vector<16x128xf32>
    %92 = vector.broadcast %cst_59 : f32 to vector<16x128xf32>
    %93 = arith.select %90, %91, %92 : vector<16x128xi1>, vector<16x128xf32>
    %94 = arith.addf %86, %93 : vector<16x128xf32>
    %cst_60 = arith.constant dense<0.000000e+00> : vector<16x128xf32>
    %95 = tpu.matmul %29, %93, %cst_60 {dimension_numbers = #tpu.dot_dimension_numbers<[1], [0], [0], [1], [0, 0, 1, 1], [], []>} : vector<16x16xf32>, vector<16x128xf32>, vector<16x128xf32> -> vector<16x128xf32>
    %96 = arith.subf %88, %95 : vector<16x128xf32>
    %cst_61 = arith.constant 0.000000e+00 : f32
    %97 = vector.broadcast %cst_61 : f32 to vector<16x128xf32>
    %98 = arith.cmpf ogt, %96, %97 : vector<16x128xf32>
    %cst_62 = arith.constant 6.250000e-11 : f32
    %cst_63 = arith.constant 0.000000e+00 : f32
    %99 = vector.broadcast %cst_62 : f32 to vector<16x128xf32>
    %100 = vector.broadcast %cst_63 : f32 to vector<16x128xf32>
    %101 = arith.select %98, %99, %100 : vector<16x128xi1>, vector<16x128xf32>
    %102 = arith.addf %94, %101 : vector<16x128xf32>
    %cst_64 = arith.constant dense<0.000000e+00> : vector<16x128xf32>
    %103 = tpu.matmul %29, %101, %cst_64 {dimension_numbers = #tpu.dot_dimension_numbers<[1], [0], [0], [1], [0, 0, 1, 1], [], []>} : vector<16x16xf32>, vector<16x128xf32>, vector<16x128xf32> -> vector<16x128xf32>
    %104 = arith.subf %96, %103 : vector<16x128xf32>
    %cst_65 = arith.constant 0.000000e+00 : f32
    %105 = vector.broadcast %cst_65 : f32 to vector<16x128xf32>
    %106 = arith.cmpf ogt, %104, %105 : vector<16x128xf32>
    %cst_66 = arith.constant 6.250000e-12 : f32
    %cst_67 = arith.constant 0.000000e+00 : f32
    %107 = vector.broadcast %cst_66 : f32 to vector<16x128xf32>
    %108 = vector.broadcast %cst_67 : f32 to vector<16x128xf32>
    %109 = arith.select %106, %107, %108 : vector<16x128xi1>, vector<16x128xf32>
    %110 = arith.addf %102, %109 : vector<16x128xf32>
    %c0_68 = arith.constant 0 : index
    %c0_69 = arith.constant 0 : index
    %111 = vector.load %arg4[%c0_68, %c0_69] : memref<32x16xf32, #tpu.memory_space<vmem>>, vector<32x16xf32>
    %cst_70 = arith.constant dense<0.000000e+00> : vector<32x128xf32>
    %112 = tpu.matmul %111, %110, %cst_70 {dimension_numbers = #tpu.dot_dimension_numbers<[1], [0], [0], [1], [0, 0, 1, 1], [], []>} : vector<32x16xf32>, vector<16x128xf32>, vector<32x128xf32> -> vector<32x128xf32>
    %113 = arith.subf %28, %112 : vector<32x128xf32>
    %c0_71 = arith.constant 0 : index
    %c0_72 = arith.constant 0 : index
    %114 = vector.load %arg12[%c0_71, %c0_72] : memref<32x128xf32, #tpu.memory_space<vmem>>, vector<32x128xf32>
    tpu.vector_store %arg12[%c0_71, %c0_72], %113 {strides = array<i32>} : memref<32x128xf32, #tpu.memory_space<vmem>>, vector<32x128xf32>,
    return
  }
  func.func @transform_0(%arg0: i32) -> (i32, i32) {
    %c0_i32 = arith.constant 0 : i32
    %c0_i32_0 = arith.constant 0 : i32
    return %c0_i32, %arg0 : i32, i32
  }
  func.func @transform_1(%arg0: i32) -> (i32, i32) {
    %c0_i32 = arith.constant 0 : i32
    %c0_i32_0 = arith.constant 0 : i32
    return %c0_i32, %arg0 : i32, i32
  }
  func.func @transform_2(%arg0: i32) -> (i32, i32) {
    %c0_i32 = arith.constant 0 : i32
    %c0_i32_0 = arith.constant 0 : i32
    %c0_i32_1 = arith.constant 0 : i32
    return %c0_i32, %c0_i32_0 : i32, i32
  }
  func.func @transform_3(%arg0: i32) -> (i32, i32) {
    %c0_i32 = arith.constant 0 : i32
    %c0_i32_0 = arith.constant 0 : i32
    %c0_i32_1 = arith.constant 0 : i32
    return %c0_i32, %c0_i32_0 : i32, i32
  }
  func.func @transform_4(%arg0: i32) -> (i32, i32) {
    %c0_i32 = arith.constant 0 : i32
    %c0_i32_0 = arith.constant 0 : i32
    %c0_i32_1 = arith.constant 0 : i32
    return %c0_i32, %c0_i32_0 : i32, i32
  }
  func.func @transform_5(%arg0: i32) -> (i32, i32) {
    %c0_i32 = arith.constant 0 : i32
    %c0_i32_0 = arith.constant 0 : i32
    %c0_i32_1 = arith.constant 0 : i32
    return %c0_i32, %c0_i32_0 : i32, i32
  }
  func.func @transform_6(%arg0: i32) -> (i32, i32) {
    %c0_i32 = arith.constant 0 : i32
    %c0_i32_0 = arith.constant 0 : i32
    %c0_i32_1 = arith.constant 0 : i32
    return %c0_i32, %c0_i32_0 : i32, i32
  }
  func.func @transform_7(%arg0: i32) -> (i32, i32) {
    %c0_i32 = arith.constant 0 : i32
    %c0_i32_0 = arith.constant 0 : i32
    %c0_i32_1 = arith.constant 0 : i32
    return %c0_i32, %c0_i32_0 : i32, i32
  }
  func.func @transform_8(%arg0: i32) -> (i32, i32) {
    %c0_i32 = arith.constant 0 : i32
    %c0_i32_0 = arith.constant 0 : i32
    %c0_i32_1 = arith.constant 0 : i32
    return %c0_i32, %c0_i32_0 : i32, i32
  }
  func.func @transform_9(%arg0: i32) -> (i32, i32) {
    %c0_i32 = arith.constant 0 : i32
    %c0_i32_0 = arith.constant 0 : i32
    %c0_i32_1 = arith.constant 0 : i32
    return %c0_i32, %c0_i32_0 : i32, i32
  }
  func.func @transform_10(%arg0: i32) -> (i32, i32) {
    %c0_i32 = arith.constant 0 : i32
    %c0_i32_0 = arith.constant 0 : i32
    %c0_i32_1 = arith.constant 0 : i32
    return %c0_i32, %c0_i32_0 : i32, i32
  }
  func.func @transform_11(%arg0: i32) -> (i32, i32) {
    %c0_i32 = arith.constant 0 : i32
    %c0_i32_0 = arith.constant 0 : i32
    return %c0_i32, %arg0 : i32, i32
  }
}

</mosaic_0001>

<llo_original>
// kernel: tpu_custom_call.1
$region0: #{tpu_custom_call.1}
  #allocation0 [shape = 'u32[]', space=smem, size = 0x4, offset = 0x4, fixed_abs, tag = 'smem constant byte address 0x4 - core index']
  #allocation1 [shape = 'u32[144,128]{1,0:T(1,128)}', space=vmem, size = 0x12000, scoped, tag = 'internal scratch']
  %s0 = inlined_call_operand.vmem [shape: f32[16,128], index: 0, kind: input, shape index: {}]
  %s1 = inlined_call_operand.vmem [shape: f32[32,128], index: 1, kind: input, shape index: {}]
  %s2 = inlined_call_operand.vmem [shape: f32[16,32], index: 2, kind: input, shape index: {}]
  %s3 = inlined_call_operand.vmem [shape: f32[32,16], index: 3, kind: input, shape index: {}]
  %s4 = inlined_call_operand.vmem [shape: f32[16,16], index: 4, kind: input, shape index: {}]
  %s5 = inlined_call_operand.vmem [shape: f32[64,16], index: 5, kind: input, shape index: {}]
  %s6 = inlined_call_operand.vmem [shape: f32[64,32], index: 6, kind: input, shape index: {}]
  %s7 = inlined_call_operand.vmem [shape: f32[64,16], index: 7, kind: input, shape index: {}]
  %s8 = inlined_call_operand.vmem [shape: f32[64,1], index: 8, kind: input, shape index: {}]
  %s9 = inlined_call_operand.vmem [shape: f32[32,64], index: 9, kind: input, shape index: {}]
  %s10 = inlined_call_operand.vmem [shape: f32[32,1], index: 10, kind: input, shape index: {}]
  %s11 = inlined_call_operand.hbm [shape: f32[32,128], index: 11, kind: output, shape index: {}]
  %s12 = sld [smem:[#allocation0]]
  $region54: #{tpu_custom_call.1} parent=0
    _
  %s14 = ssub.s32 1, %s12
  %s15 = scalar_select 0, %s14, %s12
  $region1: #{tpu_custom_call.1} parent=0
    #allocation2 [shape = 'u8[16384]{0}', space=vmem, size = 0x4000, scoped, tag = 'output window, operand 0, single buffered']
    #allocation3 [shape = 's32[1]{0}', space=sflag, size = 0x4, scoped, tag = 'scoped memory for tpu_custom_call.1']
    %16 = vsyncpa [#allocation3], 0
    // Predicated region
    $region2: #{tpu_custom_call.1} parent=1 // pred_check
      _
    $region3: #{tpu_custom_call.1} parent=1 // pred_check_branch
      %18 = sbr.rel (0) target = $region5
    $region4: #{tpu_custom_call.1} parent=1 // pred_region
      _
    $region5: #{tpu_custom_call.1} parent=1 // pred_fallthru
      _
    // Predicated region
    $region6: #{tpu_custom_call.1} parent=1 // pred_check
      _
    $region7: #{tpu_custom_call.1} parent=1 // pred_check_branch
      %20 = sbr.rel (0) target = $region9
    $region8: #{tpu_custom_call.1} parent=1 // pred_region
      _
    $region9: #{tpu_custom_call.1} parent=1 // pred_fallthru
      _
    // Predicated region
    $region10: #{tpu_custom_call.1} parent=1 // pred_check
      _
    $region11: #{tpu_custom_call.1} parent=1 // pred_check_branch
      %22 = sbr.rel (0) target = $region13
    $region12: #{tpu_custom_call.1} parent=1 // pred_region
      _
    $region13: #{tpu_custom_call.1} parent=1 // pred_fallthru
      _
    // Predicated region
    $region14: #{tpu_custom_call.1} parent=1 // pred_check
      _
    $region15: #{tpu_custom_call.1} parent=1 // pred_check_branch
      %24 = sbr.rel (0) target = $region17
    $region16: #{tpu_custom_call.1} parent=1 // pred_region
      _
    $region17: #{tpu_custom_call.1} parent=1 // pred_fallthru
      _
    // Predicated region
    $region18: #{tpu_custom_call.1} parent=1 // pred_check
      _
    $region19: #{tpu_custom_call.1} parent=1 // pred_check_branch
      %26 = sbr.rel (0) target = $region21
    $region20: #{tpu_custom_call.1} parent=1 // pred_region
      _
    $region21: #{tpu_custom_call.1} parent=1 // pred_fallthru
      _
    // Predicated region
    $region22: #{tpu_custom_call.1} parent=1 // pred_check
      _
    $region23: #{tpu_custom_call.1} parent=1 // pred_check_branch
      %28 = sbr.rel (0) target = $region25
    $region24: #{tpu_custom_call.1} parent=1 // pred_region
      _
    $region25: #{tpu_custom_call.1} parent=1 // pred_fallthru
      _
    // Predicated region
    $region26: #{tpu_custom_call.1} parent=1 // pred_check
      _
    $region27: #{tpu_custom_call.1} parent=1 // pred_check_branch
      %30 = sbr.rel (0) target = $region29
    $region28: #{tpu_custom_call.1} parent=1 // pred_region
      _
    $region29: #{tpu_custom_call.1} parent=1 // pred_fallthru
      _
    // Predicated region
    $region30: #{tpu_custom_call.1} parent=1 // pred_check
      _
    $region31: #{tpu_custom_call.1} parent=1 // pred_check_branch
      %32 = sbr.rel (0) target = $region33
    $region32: #{tpu_custom_call.1} parent=1 // pred_region
      _
    $region33: #{tpu_custom_call.1} parent=1 // pred_fallthru
      _
    // Predicated region
    $region34: #{tpu_custom_call.1} parent=1 // pred_check
      _
    $region35: #{tpu_custom_call.1} parent=1 // pred_check_branch
      %34 = sbr.rel (0) target = $region37
    $region36: #{tpu_custom_call.1} parent=1 // pred_region
      _
    $region37: #{tpu_custom_call.1} parent=1 // pred_fallthru
      _
    // Predicated region
    $region38: #{tpu_custom_call.1} parent=1 // pred_check
      _
    $region39: #{tpu_custom_call.1} parent=1 // pred_check_branch
      %36 = sbr.rel (0) target = $region41
    $region40: #{tpu_custom_call.1} parent=1 // pred_region
      _
    $region41: #{tpu_custom_call.1} parent=1 // pred_fallthru
      _
    // Predicated region
    $region42: #{tpu_custom_call.1} parent=1 // pred_check
      _
    $region43: #{tpu_custom_call.1} parent=1 // pred_check_branch
      %38 = sbr.rel (0) target = $region45
    $region44: #{tpu_custom_call.1} parent=1 // pred_region
      _
    $region45: #{tpu_custom_call.1} parent=1 // pred_fallthru
      _
    %v39 = vld [vmem:[%s0] sm:$0xff]
    %v40 = vld [vmem:[%s0 + $0x8] sm:$0xff]
    %v41 = vld [vmem:[%s1] sm:$0xff]
    %v42 = vld [vmem:[%s1 + $0x8] sm:$0xff]
    %v43 = vld [vmem:[%s1 + $0x10] sm:$0xff]
    %v44 = vld [vmem:[%s1 + $0x18] sm:$0xff]
    %v45 = vld [vmem:[%s2] sm:$0xff]
    %v46 = vld [vmem:[%s2 + $0x8] sm:$0xff]
    %vm47 = vcmask 261120
    %v49 = vsel %vm47, %v45, 0
    %v52 = vsel %vm47, %v46, 0
    %54 = vmatprep.subr.mxu0 0.0
    %55 = vmatpush1.msra.mxu0 %v41
    %56 = vmatprep.subr.mxu0 0.0
    %57 = vmatpush1.msra.mxu0 %v42
    %58 = vmatprep.subr.mxu0 0.0
    %59 = vmatpush1.msra.mxu0 %v43
    %60 = vmatprep.subr.mxu0 0.0
    %61 = vmatpush1.msra.mxu0 %v44
    %62 = vmatprep.subr.mxu0 0.0
    %63 = vmatpush1.msra.mxu0 0.0
    %64 = vmatprep.subr.mxu0 0.0
    %65 = vmatpush1.msra.mxu0 0.0
    %66 = vmatprep.subr.mxu0 0.0
    %67 = vmatpush1.msra.mxu0 0.0
    %68 = vmatprep.subr.mxu0 0.0
    %69 = vmatpush1.msra.mxu0 0.0
    %70 = vmatprep.subr.mxu0 0.0
    %71 = vmatpush1.msra.mxu0 0.0
    %72 = vmatprep.subr.mxu0 0.0
    %73 = vmatpush1.msra.mxu0 0.0
    %74 = vmatprep.subr.mxu0 0.0
    %75 = vmatpush1.msra.mxu0 0.0
    %76 = vmatprep.subr.mxu0 0.0
    %77 = vmatpush1.msra.mxu0 0.0
    %78 = vmatprep.subr.mxu0 0.0
    %79 = vmatpush1.msra.mxu0 0.0
    %80 = vmatprep.subr.mxu0 0.0
    %81 = vmatpush1.msra.mxu0 0.0
    %82 = vmatprep.subr.mxu0 0.0
    %83 = vmatpush1.msra.mxu0 0.0
    %84 = vmatprep.subr.mxu0 0.0
    %85 = vmatpush1.msra.mxu0 0.0
    %86 = vmatprep.subr.mxu0 0.0
    %87 = vmatpush1.msra.mxu0 0.0
    %88 = vmatprep.subr.mxu0 0.0
    %89 = vmatpush1.msra.mxu0 0.0
    %90 = vmatprep.subr.mxu0 0.0
    %91 = vmatpush1.msra.mxu0 0.0
    %92 = vmatprep.subr.mxu0 0.0
    %93 = vmatpush1.msra.mxu0 0.0
    %94 = vmatprep.subr.mxu0 0.0
    %95 = vmatpush1.msra.mxu0 0.0
    %96 = vmatprep.subr.mxu0 0.0
    %97 = vmatpush1.msra.mxu0 0.0
    %98 = vmatprep.subr.mxu0 0.0
    %99 = vmatpush1.msra.mxu0 0.0
    %100 = vmatprep.subr.mxu0 0.0
    %101 = vmatpush1.msra.mxu0 0.0
    %102 = vmatprep.subr.mxu0 0.0
    %103 = vmatpush1.msra.mxu0 0.0
    %104 = vmatprep.subr.mxu0 0.0
    %105 = vmatpush1.msra.mxu0 0.0
    %106 = vmatprep.subr.mxu0 0.0
    %107 = vmatpush1.msra.mxu0 0.0
    %108 = vmatprep.subr.mxu0 0.0
    %109 = vmatpush1.msra.mxu0 0.0
    %110 = vmatprep.subr.mxu0 0.0
    %111 = vmatpush1.msra.mxu0 0.0
    %112 = vmatprep.subr.mxu0 0.0
    %113 = vmatpush1.msra.mxu0 0.0
    %114 = vmatprep.subr.mxu0 0.0
    %115 = vmatpush1.msra.mxu0 0.0
    %116 = vmatprep.subr.mxu0 0.0
    %117 = vmatpush1.msra.mxu0 0.0
    %118 = vmatprep.mubr.f32.mxu0 0.0
    %119 = vmatmul.mubr.f32.gmra.mrb[0].mxu0 %v49
    %v120 = vpop.f32.mrb[0].mxu0
    %v121 = vadd.f32 0.0, %v120
    %v122 = vpop.f32.mrb[0].mxu0
    %123 = vmatprep.mubr.f32.mxu0 0.0
    %124 = vmatmul.mubr.f32.gmra.mrb[0].mxu0 %v52
    %v125 = vpop.f32.mrb[0].mxu0
    %v126 = vadd.f32 0.0, %v125
    %v127 = vpop.f32.mrb[0].mxu0
    %128 = vdwg.mxu0
    %v129 = vsub.f32 %v121, %v39
    %v130 = vsub.f32 %v126, %v40
    %vm131 = vcmp.gt.f32.partialorder %v129, 0.0
    %vm132 = vcmp.gt.f32.partialorder %v130, 0.0
    %v133 = vsel %vm131, 1.0, 0.0
    %v134 = vsel %vm132, 1.0, 0.0
    %v135 = vld [vmem:[%s5] sm:$0xff]
    %v136 = vld [vmem:[%s5 + $0x8] sm:$0xff]
    %v137 = vld [vmem:[%s5 + $0x10] sm:$0xff]
    %v138 = vld [vmem:[%s5 + $0x18] sm:$0xff]
    %v139 = vld [vmem:[%s5 + $0x20] sm:$0xff]
    %v140 = vld [vmem:[%s5 + $0x28] sm:$0xff]
    %v141 = vld [vmem:[%s5 + $0x30] sm:$0xff]
    %v142 = vld [vmem:[%s5 + $0x38] sm:$0xff]
    %v143 = vld [vmem:[%s6] sm:$0xff]
    %v144 = vld [vmem:[%s6 + $0x8] sm:$0xff]
    %v145 = vld [vmem:[%s6 + $0x10] sm:$0xff]
    %v146 = vld [vmem:[%s6 + $0x18] sm:$0xff]
    %v147 = vld [vmem:[%s6 + $0x20] sm:$0xff]
    %v148 = vld [vmem:[%s6 + $0x28] sm:$0xff]
    %v149 = vld [vmem:[%s6 + $0x30] sm:$0xff]
    %v150 = vld [vmem:[%s6 + $0x38] sm:$0xff]
    %v152 = vsel %vm47, %v143, 0
    %v155 = vsel %vm47, %v144, 0
    %v158 = vsel %vm47, %v145, 0
    %v161 = vsel %vm47, %v146, 0
    %v164 = vsel %vm47, %v147, 0
    %v167 = vsel %vm47, %v148, 0
    %v170 = vsel %vm47, %v149, 0
    %v173 = vsel %vm47, %v150, 0
    %175 = vmatprep.subr.mxu0 0.0
    %176 = vmatpush1.msra.mxu0 %v41
    %177 = vmatprep.subr.mxu0 0.0
    %178 = vmatpush1.msra.mxu0 %v42
    %179 = vmatprep.subr.mxu0 0.0
    %180 = vmatpush1.msra.mxu0 %v43
    %181 = vmatprep.subr.mxu0 0.0
    %182 = vmatpush1.msra.mxu0 %v44
    %183 = vmatprep.subr.mxu0 0.0
    %184 = vmatpush1.msra.mxu0 0.0
    %185 = vmatprep.subr.mxu0 0.0
    %186 = vmatpush1.msra.mxu0 0.0
    %187 = vmatprep.subr.mxu0 0.0
    %188 = vmatpush1.msra.mxu0 0.0
    %189 = vmatprep.subr.mxu0 0.0
    %190 = vmatpush1.msra.mxu0 0.0
    %191 = vmatprep.subr.mxu0 0.0
    %192 = vmatpush1.msra.mxu0 0.0
    %193 = vmatprep.subr.mxu0 0.0
    %194 = vmatpush1.msra.mxu0 0.0
    %195 = vmatprep.subr.mxu0 0.0
    %196 = vmatpush1.msra.mxu0 0.0
    %197 = vmatprep.subr.mxu0 0.0
    %198 = vmatpush1.msra.mxu0 0.0
    %199 = vmatprep.subr.mxu0 0.0
    %200 = vmatpush1.msra.mxu0 0.0
    %201 = vmatprep.subr.mxu0 0.0
    %202 = vmatpush1.msra.mxu0 0.0
    %203 = vmatprep.subr.mxu0 0.0
    %204 = vmatpush1.msra.mxu0 0.0
    %205 = vmatprep.subr.mxu0 0.0
    %206 = vmatpush1.msra.mxu0 0.0
    %207 = vmatprep.subr.mxu0 0.0
    %208 = vmatpush1.msra.mxu0 0.0
    %209 = vmatprep.subr.mxu0 0.0
    %210 = vmatpush1.msra.mxu0 0.0
    %211 = vmatprep.subr.mxu0 0.0
    %212 = vmatpush1.msra.mxu0 0.0
    %213 = vmatprep.subr.mxu0 0.0
    %214 = vmatpush1.msra.mxu0 0.0
    %215 = vmatprep.subr.mxu0 0.0
    %216 = vmatpush1.msra.mxu0 0.0
    %217 = vmatprep.subr.mxu0 0.0
    %218 = vmatpush1.msra.mxu0 0.0
    %219 = vmatprep.subr.mxu0 0.0
    %220 = vmatpush1.msra.mxu0 0.0
    %221 = vmatprep.subr.mxu0 0.0
    %222 = vmatpush1.msra.mxu0 0.0
    %223 = vmatprep.subr.mxu0 0.0
    %224 = vmatpush1.msra.mxu0 0.0
    %225 = vmatprep.subr.mxu0 0.0
    %226 = vmatpush1.msra.mxu0 0.0
    %227 = vmatprep.subr.mxu0 0.0
    %228 = vmatpush1.msra.mxu0 0.0
    %229 = vmatprep.subr.mxu0 0.0
    %230 = vmatpush1.msra.mxu0 0.0
    %231 = vmatprep.subr.mxu0 0.0
    %232 = vmatpush1.msra.mxu0 0.0
    %233 = vmatprep.subr.mxu0 0.0
    %234 = vmatpush1.msra.mxu0 0.0
    %235 = vmatprep.subr.mxu0 0.0
    %236 = vmatpush1.msra.mxu0 0.0
    %237 = vmatprep.subr.mxu0 0.0
    %238 = vmatpush1.msra.mxu0 0.0
    %239 = vmatprep.mubr.f32.mxu0 0.0
    %240 = vmatmul.mubr.f32.gmra.mrb[0].mxu0 %v152
    %v241 = vpop.f32.mrb[0].mxu0
    %v242 = vadd.f32 0.0, %v241
    %v243 = vpop.f32.mrb[0].mxu0
    %244 = vmatprep.mubr.f32.mxu0 0.0
    %245 = vmatmul.mubr.f32.gmra.mrb[0].mxu0 %v155
    %v246 = vpop.f32.mrb[0].mxu0
    %v247 = vadd.f32 0.0, %v246
    %v248 = vpop.f32.mrb[0].mxu0
    %249 = vmatprep.mubr.f32.mxu0 0.0
    %250 = vmatmul.mubr.f32.gmra.mrb[0].mxu0 %v158
    %v251 = vpop.f32.mrb[0].mxu0
    %v252 = vadd.f32 0.0, %v251
    %v253 = vpop.f32.mrb[0].mxu0
    %254 = vmatprep.mubr.f32.mxu0 0.0
    %255 = vmatmul.mubr.f32.gmra.mrb[0].mxu0 %v161
    %v256 = vpop.f32.mrb[0].mxu0
    %v257 = vadd.f32 0.0, %v256
    %v258 = vpop.f32.mrb[0].mxu0
    %259 = vmatprep.mubr.f32.mxu0 0.0
    %260 = vmatmul.mubr.f32.gmra.mrb[0].mxu0 %v164
    %v261 = vpop.f32.mrb[0].mxu0
    %v262 = vadd.f32 0.0, %v261
    %v263 = vpop.f32.mrb[0].mxu0
    %264 = vmatprep.mubr.f32.mxu0 0.0
    %265 = vmatmul.mubr.f32.gmra.mrb[0].mxu0 %v167
    %v266 = vpop.f32.mrb[0].mxu0
    %v267 = vadd.f32 0.0, %v266
    %v268 = vpop.f32.mrb[0].mxu0
    %269 = vmatprep.mubr.f32.mxu0 0.0
    %270 = vmatmul.mubr.f32.gmra.mrb[0].mxu0 %v170
    %v271 = vpop.f32.mrb[0].mxu0
    %v272 = vadd.f32 0.0, %v271
    %v273 = vpop.f32.mrb[0].mxu0
    %274 = vmatprep.mubr.f32.mxu0 0.0
    %275 = vmatmul.mubr.f32.gmra.mrb[0].mxu0 %v173
    %v276 = vpop.f32.mrb[0].mxu0
    %v277 = vadd.f32 0.0, %v276
    %v278 = vpop.f32.mrb[0].mxu0
    %279 = vdwg.mxu0
    %vm280 = vcmask 130048
    %v282 = vsel %vm280, %v135, 0
    %v285 = vsel %vm280, %v136, 0
    %v288 = vsel %vm280, %v137, 0
    %v291 = vsel %vm280, %v138, 0
    %v294 = vsel %vm280, %v139, 0
    %v297 = vsel %vm280, %v140, 0
    %v300 = vsel %vm280, %v141, 0
    %v303 = vsel %vm280, %v142, 0
    %305 = vmatprep.subr.mxu0 0.0
    %306 = vmatpush1.msra.mxu0 %v39
    %307 = vmatprep.subr.mxu0 0.0
    %308 = vmatpush1.msra.mxu0 %v40
    %309 = vmatprep.subr.mxu0 0.0
    %310 = vmatpush1.msra.mxu0 0.0
    %311 = vmatprep.subr.mxu0 0.0
    %312 = vmatpush1.msra.mxu0 0.0
    %313 = vmatprep.subr.mxu0 0.0
    %314 = vmatpush1.msra.mxu0 0.0
    %315 = vmatprep.subr.mxu0 0.0
    %316 = vmatpush1.msra.mxu0 0.0
    %317 = vmatprep.subr.mxu0 0.0
    %318 = vmatpush1.msra.mxu0 0.0
    %319 = vmatprep.subr.mxu0 0.0
    %320 = vmatpush1.msra.mxu0 0.0
    %321 = vmatprep.subr.mxu0 0.0
    %322 = vmatpush1.msra.mxu0 0.0
    %323 = vmatprep.subr.mxu0 0.0
    %324 = vmatpush1.msra.mxu0 0.0
    %325 = vmatprep.subr.mxu0 0.0
    %326 = vmatpush1.msra.mxu0 0.0
    %327 = vmatprep.subr.mxu0 0.0
    %328 = vmatpush1.msra.mxu0 0.0
    %329 = vmatprep.subr.mxu0 0.0
    %330 = vmatpush1.msra.mxu0 0.0
    %331 = vmatprep.subr.mxu0 0.0
    %332 = vmatpush1.msra.mxu0 0.0
    %333 = vmatprep.subr.mxu0 0.0
    %334 = vmatpush1.msra.mxu0 0.0
    %335 = vmatprep.subr.mxu0 0.0
    %336 = vmatpush1.msra.mxu0 0.0
    %337 = vmatprep.subr.mxu0 0.0
    %338 = vmatpush1.msra.mxu0 0.0
    %339 = vmatprep.subr.mxu0 0.0
    %340 = vmatpush1.msra.mxu0 0.0
    %341 = vmatprep.subr.mxu0 0.0
    %342 = vmatpush1.msra.mxu0 0.0
    %343 = vmatprep.subr.mxu0 0.0
    %344 = vmatpush1.msra.mxu0 0.0
    %345 = vmatprep.subr.mxu0 0.0
    %346 = vmatpush1.msra.mxu0 0.0
    %347 = vmatprep.subr.mxu0 0.0
    %348 = vmatpush1.msra.mxu0 0.0
    %349 = vmatprep.subr.mxu0 0.0
    %350 = vmatpush1.msra.mxu0 0.0
    %351 = vmatprep.subr.mxu0 0.0
    %352 = vmatpush1.msra.mxu0 0.0
    %353 = vmatprep.subr.mxu0 0.0
    %354 = vmatpush1.msra.mxu0 0.0
    %355 = vmatprep.subr.mxu0 0.0
    %356 = vmatpush1.msra.mxu0 0.0
    %357 = vmatprep.subr.mxu0 0.0
    %358 = vmatpush1.msra.mxu0 0.0
    %359 = vmatprep.subr.mxu0 0.0
    %360 = vmatpush1.msra.mxu0 0.0
    %361 = vmatprep.subr.mxu0 0.0
    %362 = vmatpush1.msra.mxu0 0.0
    %363 = vmatprep.subr.mxu0 0.0
    %364 = vmatpush1.msra.mxu0 0.0
    %365 = vmatprep.subr.mxu0 0.0
    %366 = vmatpush1.msra.mxu0 0.0
    %367 = vmatprep.subr.mxu0 0.0
    %368 = vmatpush1.msra.mxu0 0.0
    %369 = vmatprep.mubr.f32.mxu0 0.0
    %370 = vmatmul.mubr.f32.gmra.mrb[0].mxu0 %v282
    %v371 = vpop.f32.mrb[0].mxu0
    %v372 = vadd.f32 %v242, %v371
    %v373 = vpop.f32.mrb[0].mxu0
    %374 = vmatprep.mubr.f32.mxu0 0.0
    %375 = vmatmul.mubr.f32.gmra.mrb[0].mxu0 %v285
    %v376 = vpop.f32.mrb[0].mxu0
    %v377 = vadd.f32 %v247, %v376
    %v378 = vpop.f32.mrb[0].mxu0
    %379 = vmatprep.mubr.f32.mxu0 0.0
    %380 = vmatmul.mubr.f32.gmra.mrb[0].mxu0 %v288
    %v381 = vpop.f32.mrb[0].mxu0
    %v382 = vadd.f32 %v252, %v381
    %v383 = vpop.f32.mrb[0].mxu0
    %384 = vmatprep.mubr.f32.mxu0 0.0
    %385 = vmatmul.mubr.f32.gmra.mrb[0].mxu0 %v291
    %v386 = vpop.f32.mrb[0].mxu0
    %v387 = vadd.f32 %v257, %v386
    %v388 = vpop.f32.mrb[0].mxu0
    %389 = vmatprep.mubr.f32.mxu0 0.0
    %390 = vmatmul.mubr.f32.gmra.mrb[0].mxu0 %v294
    %v391 = vpop.f32.mrb[0].mxu0
    %v392 = vadd.f32 %v262, %v391
    %v393 = vpop.f32.mrb[0].mxu0
    %394 = vmatprep.mubr.f32.mxu0 0.0
    %395 = vmatmul.mubr.f32.gmra.mrb[0].mxu0 %v297
    %v396 = vpop.f32.mrb[0].mxu0
    %v397 = vadd.f32 %v267, %v396
    %v398 = vpop.f32.mrb[0].mxu0
    %399 = vmatprep.mubr.f32.mxu0 0.0
    %400 = vmatmul.mubr.f32.gmra.mrb[0].mxu0 %v300
    %v401 = vpop.f32.mrb[0].mxu0
    %v402 = vadd.f32 %v272, %v401
    %v403 = vpop.f32.mrb[0].mxu0
    %404 = vmatprep.mubr.f32.mxu0 0.0
    %405 = vmatmul.mubr.f32.gmra.mrb[0].mxu0 %v303
    %v406 = vpop.f32.mrb[0].mxu0
    %v407 = vadd.f32 %v277, %v406
    %v408 = vpop.f32.mrb[0].mxu0
    %409 = vdwg.mxu0
    %v410 = vld [vmem:[%s7] sm:$0xff]
    %v411 = vld [vmem:[%s7 + $0x8] sm:$0xff]
    %v412 = vld [vmem:[%s7 + $0x10] sm:$0xff]
    %v413 = vld [vmem:[%s7 + $0x18] sm:$0xff]
    %v414 = vld [vmem:[%s7 + $0x20] sm:$0xff]
    %v415 = vld [vmem:[%s7 + $0x28] sm:$0xff]
    %v416 = vld [vmem:[%s7 + $0x30] sm:$0xff]
    %v417 = vld [vmem:[%s7 + $0x38] sm:$0xff]
    %v419 = vsel %vm280, %v410, 0
    %v422 = vsel %vm280, %v411, 0
    %v425 = vsel %vm280, %v412, 0
    %v428 = vsel %vm280, %v413, 0
    %v431 = vsel %vm280, %v414, 0
    %v434 = vsel %vm280, %v415, 0
    %v437 = vsel %vm280, %v416, 0
    %v440 = vsel %vm280, %v417, 0
    %442 = vmatprep.subr.mxu0 0.0
    %443 = vmatpush1.msra.mxu0 %v133
    %444 = vmatprep.subr.mxu0 0.0
    %445 = vmatpush1.msra.mxu0 %v134
    %446 = vmatprep.subr.mxu0 0.0
    %447 = vmatpush1.msra.mxu0 0.0
    %448 = vmatprep.subr.mxu0 0.0
    %449 = vmatpush1.msra.mxu0 0.0
    %450 = vmatprep.subr.mxu0 0.0
    %451 = vmatpush1.msra.mxu0 0.0
    %452 = vmatprep.subr.mxu0 0.0
    %453 = vmatpush1.msra.mxu0 0.0
    %454 = vmatprep.subr.mxu0 0.0
    %455 = vmatpush1.msra.mxu0 0.0
    %456 = vmatprep.subr.mxu0 0.0
    %457 = vmatpush1.msra.mxu0 0.0
    %458 = vmatprep.subr.mxu0 0.0
    %459 = vmatpush1.msra.mxu0 0.0
    %460 = vmatprep.subr.mxu0 0.0
    %461 = vmatpush1.msra.mxu0 0.0
    %462 = vmatprep.subr.mxu0 0.0
    %463 = vmatpush1.msra.mxu0 0.0
    %464 = vmatprep.subr.mxu0 0.0
    %465 = vmatpush1.msra.mxu0 0.0
    %466 = vmatprep.subr.mxu0 0.0
    %467 = vmatpush1.msra.mxu0 0.0
    %468 = vmatprep.subr.mxu0 0.0
    %469 = vmatpush1.msra.mxu0 0.0
    %470 = vmatprep.subr.mxu0 0.0
    %471 = vmatpush1.msra.mxu0 0.0
    %472 = vmatprep.subr.mxu0 0.0
    %473 = vmatpush1.msra.mxu0 0.0
    %474 = vmatprep.subr.mxu0 0.0
    %475 = vmatpush1.msra.mxu0 0.0
    %476 = vmatprep.subr.mxu0 0.0
    %477 = vmatpush1.msra.mxu0 0.0
    %478 = vmatprep.subr.mxu0 0.0
    %479 = vmatpush1.msra.mxu0 0.0
    %480 = vmatprep.subr.mxu0 0.0
    %481 = vmatpush1.msra.mxu0 0.0
    %482 = vmatprep.subr.mxu0 0.0
    %483 = vmatpush1.msra.mxu0 0.0
    %484 = vmatprep.subr.mxu0 0.0
    %485 = vmatpush1.msra.mxu0 0.0
    %486 = vmatprep.subr.mxu0 0.0
    %487 = vmatpush1.msra.mxu0 0.0
    %488 = vmatprep.subr.mxu0 0.0
    %489 = vmatpush1.msra.mxu0 0.0
    %490 = vmatprep.subr.mxu0 0.0
    %491 = vmatpush1.msra.mxu0 0.0
    %492 = vmatprep.subr.mxu0 0.0
    %493 = vmatpush1.msra.mxu0 0.0
    %494 = vmatprep.subr.mxu0 0.0
    %495 = vmatpush1.msra.mxu0 0.0
    %496 = vmatprep.subr.mxu0 0.0
    %497 = vmatpush1.msra.mxu0 0.0
    %498 = vmatprep.subr.mxu0 0.0
    %499 = vmatpush1.msra.mxu0 0.0
    %500 = vmatprep.subr.mxu0 0.0
    %501 = vmatpush1.msra.mxu0 0.0
    %502 = vmatprep.subr.mxu0 0.0
    %503 = vmatpush1.msra.mxu0 0.0
    %504 = vmatprep.subr.mxu0 0.0
    %505 = vmatpush1.msra.mxu0 0.0
    %506 = vmatprep.mubr.f32.mxu0 0.0
    %507 = vmatmul.mubr.f32.gmra.mrb[0].mxu0 %v419
    %v508 = vpop.f32.mrb[0].mxu0
    %v509 = vadd.f32 0.0, %v508
    %v510 = vpop.f32.mrb[0].mxu0
    %511 = vmatprep.mubr.f32.mxu0 0.0
    %512 = vmatmul.mubr.f32.gmra.mrb[0].mxu0 %v422
    %v513 = vpop.f32.mrb[0].mxu0
    %v514 = vadd.f32 0.0, %v513
    %v515 = vpop.f32.mrb[0].mxu0
    %516 = vmatprep.mubr.f32.mxu0 0.0
    %517 = vmatmul.mubr.f32.gmra.mrb[0].mxu0 %v425
    %v518 = vpop.f32.mrb[0].mxu0
    %v519 = vadd.f32 0.0, %v518
    %v520 = vpop.f32.mrb[0].mxu0
    %521 = vmatprep.mubr.f32.mxu0 0.0
    %522 = vmatmul.mubr.f32.gmra.mrb[0].mxu0 %v428
    %v523 = vpop.f32.mrb[0].mxu0
    %v524 = vadd.f32 0.0, %v523
    %v525 = vpop.f32.mrb[0].mxu0
    %526 = vmatprep.mubr.f32.mxu0 0.0
    %527 = vmatmul.mubr.f32.gmra.mrb[0].mxu0 %v431
    %v528 = vpop.f32.mrb[0].mxu0
    %v529 = vadd.f32 0.0, %v528
    %v530 = vpop.f32.mrb[0].mxu0
    %531 = vmatprep.mubr.f32.mxu0 0.0
    %532 = vmatmul.mubr.f32.gmra.mrb[0].mxu0 %v434
    %v533 = vpop.f32.mrb[0].mxu0
    %v534 = vadd.f32 0.0, %v533
    %v535 = vpop.f32.mrb[0].mxu0
    %536 = vmatprep.mubr.f32.mxu0 0.0
    %537 = vmatmul.mubr.f32.gmra.mrb[0].mxu0 %v437
    %v538 = vpop.f32.mrb[0].mxu0
    %v539 = vadd.f32 0.0, %v538
    %v540 = vpop.f32.mrb[0].mxu0
    %541 = vmatprep.mubr.f32.mxu0 0.0
    %542 = vmatmul.mubr.f32.gmra.mrb[0].mxu0 %v440
    %v543 = vpop.f32.mrb[0].mxu0
    %v544 = vadd.f32 0.0, %v543
    %v545 = vpop.f32.mrb[0].mxu0
    %546 = vdwg.mxu0
    %v547 = vadd.f32 %v372, %v509
    %v548 = vadd.f32 %v377, %v514
    %v549 = vadd.f32 %v382, %v519
    %v550 = vadd.f32 %v387, %v524
    %v551 = vadd.f32 %v392, %v529
    %v552 = vadd.f32 %v397, %v534
    %v553 = vadd.f32 %v402, %v539
    %v554 = vadd.f32 %v407, %v544
    %v555 = vld [vmem:[%s8] sm:$0xff]
    %v556 = vld [vmem:[%s8 + $0x8] sm:$0xff]
    %v557 = vld [vmem:[%s8 + $0x10] sm:$0xff]
    %v558 = vld [vmem:[%s8 + $0x18] sm:$0xff]
    %v559 = vld [vmem:[%s8 + $0x20] sm:$0xff]
    %v560 = vld [vmem:[%s8 + $0x28] sm:$0xff]
    %v561 = vld [vmem:[%s8 + $0x30] sm:$0xff]
    %v562 = vld [vmem:[%s8 + $0x38] sm:$0xff]
    %564 = vset.pattern.permute.xlu0 0
    %565 = vperm.xlu0 %564, %v555
    %v566 = vpop.permute.xlu0 %565
    %569 = vset.pattern.permute.xlu0 0
    %570 = vperm.xlu0 %569, %v556
    %v571 = vpop.permute.xlu0 %570
    %574 = vset.pattern.permute.xlu0 0
    %575 = vperm.xlu0 %574, %v557
    %v576 = vpop.permute.xlu0 %575
    %579 = vset.pattern.permute.xlu0 0
    %580 = vperm.xlu0 %579, %v558
    %v581 = vpop.permute.xlu0 %580
    %584 = vset.pattern.permute.xlu0 0
    %585 = vperm.xlu0 %584, %v559
    %v586 = vpop.permute.xlu0 %585
    %589 = vset.pattern.permute.xlu0 0
    %590 = vperm.xlu0 %589, %v560
    %v591 = vpop.permute.xlu0 %590
    %594 = vset.pattern.permute.xlu0 0
    %595 = vperm.xlu0 %594, %v561
    %v596 = vpop.permute.xlu0 %595
    %599 = vset.pattern.permute.xlu0 0
    %600 = vperm.xlu0 %599, %v562
    %v601 = vpop.permute.xlu0 %600
    %v603 = vadd.f32 %v547, %v566
    %v604 = vadd.f32 %v548, %v571
    %v605 = vadd.f32 %v549, %v576
    %v606 = vadd.f32 %v550, %v581
    %v607 = vadd.f32 %v551, %v586
    %v608 = vadd.f32 %v552, %v591
    %v609 = vadd.f32 %v553, %v596
    %v610 = vadd.f32 %v554, %v601
    %v611 = vmax.f32 %v603, 0.0
    %v612 = vmax.f32 %v604, 0.0
    %v613 = vmax.f32 %v605, 0.0
    %v614 = vmax.f32 %v606, 0.0
    %v615 = vmax.f32 %v607, 0.0
    %v616 = vmax.f32 %v608, 0.0
    %v617 = vmax.f32 %v609, 0.0
    %v618 = vmax.f32 %v610, 0.0
    %v619 = vld [vmem:[%s9] sm:$0xff]
    %v620 = vld [vmem:[%s9 + $0x8] sm:$0xff]
    %v621 = vld [vmem:[%s9 + $0x10] sm:$0xff]
    %v622 = vld [vmem:[%s9 + $0x18] sm:$0xff]
    %v623 = vld [vmem:[%s10] sm:$0xff]
    %v624 = vld [vmem:[%s10 + $0x8] sm:$0xff]
    %v625 = vld [vmem:[%s10 + $0x10] sm:$0xff]
    %v626 = vld [vmem:[%s10 + $0x18] sm:$0xff]
    %628 = vset.pattern.permute.xlu0 0
    %629 = vperm.xlu0 %628, %v623
    %v630 = vpop.permute.xlu0 %629
    %633 = vset.pattern.permute.xlu0 0
    %634 = vperm.xlu0 %633, %v624
    %v635 = vpop.permute.xlu0 %634
    %638 = vset.pattern.permute.xlu0 0
    %639 = vperm.xlu0 %638, %v625
    %v640 = vpop.permute.xlu0 %639
    %643 = vset.pattern.permute.xlu0 0
    %644 = vperm.xlu0 %643, %v626
    %v645 = vpop.permute.xlu0 %644
    %vm647 = vcmask 523264
    %v649 = vsel %vm647, %v619, 0
    %v652 = vsel %vm647, %v620, 0
    %v655 = vsel %vm647, %v621, 0
    %v658 = vsel %vm647, %v622, 0
    %660 = vmatprep.subr.mxu0 0.0
    %661 = vmatpush1.msra.mxu0 %v611
    %662 = vmatprep.subr.mxu0 0.0
    %663 = vmatpush1.msra.mxu0 %v612
    %664 = vmatprep.subr.mxu0 0.0
    %665 = vmatpush1.msra.mxu0 %v613
    %666 = vmatprep.subr.mxu0 0.0
    %667 = vmatpush1.msra.mxu0 %v614
    %668 = vmatprep.subr.mxu0 0.0
    %669 = vmatpush1.msra.mxu0 %v615
    %670 = vmatprep.subr.mxu0 0.0
    %671 = vmatpush1.msra.mxu0 %v616
    %672 = vmatprep.subr.mxu0 0.0
    %673 = vmatpush1.msra.mxu0 %v617
    %674 = vmatprep.subr.mxu0 0.0
    %675 = vmatpush1.msra.mxu0 %v618
    %676 = vmatprep.subr.mxu0 0.0
    %677 = vmatpush1.msra.mxu0 0.0
    %678 = vmatprep.subr.mxu0 0.0
    %679 = vmatpush1.msra.mxu0 0.0
    %680 = vmatprep.subr.mxu0 0.0
    %681 = vmatpush1.msra.mxu0 0.0
    %682 = vmatprep.subr.mxu0 0.0
    %683 = vmatpush1.msra.mxu0 0.0
    %684 = vmatprep.subr.mxu0 0.0
    %685 = vmatpush1.msra.mxu0 0.0
    %686 = vmatprep.subr.mxu0 0.0
    %687 = vmatpush1.msra.mxu0 0.0
    %688 = vmatprep.subr.mxu0 0.0
    %689 = vmatpush1.msra.mxu0 0.0
    %690 = vmatprep.subr.mxu0 0.0
    %691 = vmatpush1.msra.mxu0 0.0
    %692 = vmatprep.subr.mxu0 0.0
    %693 = vmatpush1.msra.mxu0 0.0
    %694 = vmatprep.subr.mxu0 0.0
    %695 = vmatpush1.msra.mxu0 0.0
    %696 = vmatprep.subr.mxu0 0.0
    %697 = vmatpush1.msra.mxu0 0.0
    %698 = vmatprep.subr.mxu0 0.0
    %699 = vmatpush1.msra.mxu0 0.0
    %700 = vmatprep.subr.mxu0 0.0
    %701 = vmatpush1.msra.mxu0 0.0
    %702 = vmatprep.subr.mxu0 0.0
    %703 = vmatpush1.msra.mxu0 0.0
    %704 = vmatprep.subr.mxu0 0.0
    %705 = vmatpush1.msra.mxu0 0.0
    %706 = vmatprep.subr.mxu0 0.0
    %707 = vmatpush1.msra.mxu0 0.0
    %708 = vmatprep.subr.mxu0 0.0
    %709 = vmatpush1.msra.mxu0 0.0
    %710 = vmatprep.subr.mxu0 0.0
    %711 = vmatpush1.msra.mxu0 0.0
    %712 = vmatprep.subr.mxu0 0.0
    %713 = vmatpush1.msra.mxu0 0.0
    %714 = vmatprep.subr.mxu0 0.0
    %715 = vmatpush1.msra.mxu0 0.0
    %716 = vmatprep.subr.mxu0 0.0
    %717 = vmatpush1.msra.mxu0 0.0
    %718 = vmatprep.subr.mxu0 0.0
    %719 = vmatpush1.msra.mxu0 0.0
    %720 = vmatprep.subr.mxu0 0.0
    %721 = vmatpush1.msra.mxu0 0.0
    %722 = vmatprep.subr.mxu0 0.0
    %723 = vmatpush1.msra.mxu0 0.0
    %724 = vmatprep.mubr.f32.mxu0 0.0
    %725 = vmatmul.mubr.f32.gmra.mrb[0].mxu0 %v649
    %v726 = vpop.f32.mrb[0].mxu0
    %v727 = vadd.f32 %v630, %v726
    %v728 = vpop.f32.mrb[0].mxu0
    %729 = vmatprep.mubr.f32.mxu0 0.0
    %730 = vmatmul.mubr.f32.gmra.mrb[0].mxu0 %v652
    %v731 = vpop.f32.mrb[0].mxu0
    %v732 = vadd.f32 %v635, %v731
    %v733 = vpop.f32.mrb[0].mxu0
    %734 = vmatprep.mubr.f32.mxu0 0.0
    %735 = vmatmul.mubr.f32.gmra.mrb[0].mxu0 %v655
    %v736 = vpop.f32.mrb[0].mxu0
    %v737 = vadd.f32 %v640, %v736
    %v738 = vpop.f32.mrb[0].mxu0
    %739 = vmatprep.mubr.f32.mxu0 0.0
    %740 = vmatmul.mubr.f32.gmra.mrb[0].mxu0 %v658
    %v741 = vpop.f32.mrb[0].mxu0
    %v742 = vadd.f32 %v645, %v741
    %v743 = vpop.f32.mrb[0].mxu0
    %744 = vdwg.mxu0
    %v745 = vadd.f32 %v41, %v727
    %v746 = vadd.f32 %v42, %v732
    %v747 = vadd.f32 %v43, %v737
    %v748 = vadd.f32 %v44, %v742
    %v749 = vld [vmem:[%s4] sm:$0xff]
    %v750 = vld [vmem:[%s4 + $0x8] sm:$0xff]
    %751 = vmatprep.subr.mxu0 0.0
    %752 = vmatpush1.msra.mxu0 %v745
    %753 = vmatprep.subr.mxu0 0.0
    %754 = vmatpush1.msra.mxu0 %v746
    %755 = vmatprep.subr.mxu0 0.0
    %756 = vmatpush1.msra.mxu0 %v747
    %757 = vmatprep.subr.mxu0 0.0
    %758 = vmatpush1.msra.mxu0 %v748
    %759 = vmatprep.subr.mxu0 0.0
    %760 = vmatpush1.msra.mxu0 0.0
    %761 = vmatprep.subr.mxu0 0.0
    %762 = vmatpush1.msra.mxu0 0.0
    %763 = vmatprep.subr.mxu0 0.0
    %764 = vmatpush1.msra.mxu0 0.0
    %765 = vmatprep.subr.mxu0 0.0
    %766 = vmatpush1.msra.mxu0 0.0
    %767 = vmatprep.subr.mxu0 0.0
    %768 = vmatpush1.msra.mxu0 0.0
    %769 = vmatprep.subr.mxu0 0.0
    %770 = vmatpush1.msra.mxu0 0.0
    %771 = vmatprep.subr.mxu0 0.0
    %772 = vmatpush1.msra.mxu0 0.0
    %773 = vmatprep.subr.mxu0 0.0
    %774 = vmatpush1.msra.mxu0 0.0
    %775 = vmatprep.subr.mxu0 0.0
    %776 = vmatpush1.msra.mxu0 0.0
    %777 = vmatprep.subr.mxu0 0.0
    %778 = vmatpush1.msra.mxu0 0.0
    %779 = vmatprep.subr.mxu0 0.0
    %780 = vmatpush1.msra.mxu0 0.0
    %781 = vmatprep.subr.mxu0 0.0
    %782 = vmatpush1.msra.mxu0 0.0
    %783 = vmatprep.subr.mxu0 0.0
    %784 = vmatpush1.msra.mxu0 0.0
    %785 = vmatprep.subr.mxu0 0.0
    %786 = vmatpush1.msra.mxu0 0.0
    %787 = vmatprep.subr.mxu0 0.0
    %788 = vmatpush1.msra.mxu0 0.0
    %789 = vmatprep.subr.mxu0 0.0
    %790 = vmatpush1.msra.mxu0 0.0
    %791 = vmatprep.subr.mxu0 0.0
    %792 = vmatpush1.msra.mxu0 0.0
    %793 = vmatprep.subr.mxu0 0.0
    %794 = vmatpush1.msra.mxu0 0.0
    %795 = vmatprep.subr.mxu0 0.0
    %796 = vmatpush1.msra.mxu0 0.0
    %797 = vmatprep.subr.mxu0 0.0
    %798 = vmatpush1.msra.mxu0 0.0
    %799 = vmatprep.subr.mxu0 0.0
    %800 = vmatpush1.msra.mxu0 0.0
    %801 = vmatprep.subr.mxu0 0.0
    %802 = vmatpush1.msra.mxu0 0.0
    %803 = vmatprep.subr.mxu0 0.0
    %804 = vmatpush1.msra.mxu0 0.0
    %805 = vmatprep.subr.mxu0 0.0
    %806 = vmatpush1.msra.mxu0 0.0
    %807 = vmatprep.subr.mxu0 0.0
    %808 = vmatpush1.msra.mxu0 0.0
    %809 = vmatprep.subr.mxu0 0.0
    %810 = vmatpush1.msra.mxu0 0.0
    %811 = vmatprep.subr.mxu0 0.0
    %812 = vmatpush1.msra.mxu0 0.0
    %813 = vmatprep.subr.mxu0 0.0
    %814 = vmatpush1.msra.mxu0 0.0
    %815 = vmatprep.mubr.f32.mxu0 0.0
    %816 = vmatmul.mubr.f32.gmra.mrb[0].mxu0 %v49
    %v817 = vpop.f32.mrb[0].mxu0
    %v818 = vadd.f32 0.0, %v817
    %v819 = vpop.f32.mrb[0].mxu0
    %820 = vmatprep.mubr.f32.mxu0 0.0
    %821 = vmatmul.mubr.f32.gmra.mrb[0].mxu0 %v52
    %v822 = vpop.f32.mrb[0].mxu0
    %v823 = vadd.f32 0.0, %v822
    %v824 = vpop.f32.mrb[0].mxu0
    %825 = vdwg.mxu0
    %v826 = vsub.f32 %v818, %v39
    %v827 = vsub.f32 %v823, %v40
    %vm828 = vcmp.gt.f32.partialorder %v826, 0.0
    %vm829 = vcmp.gt.f32.partialorder %v827, 0.0
    %v830 = vsel %vm828, 0.00625, 0.0
    %v831 = vsel %vm829, 0.00625, 0.0
    %v832 = vadd.f32 %v830, 0.0
    %v833 = vadd.f32 %v831, 0.0
    %v835 = vsel %vm280, %v749, 0
    %v838 = vsel %vm280, %v750, 0
    %840 = vmatprep.subr.mxu0 0.0
    %841 = vmatpush1.msra.mxu0 %v830
    %842 = vmatprep.subr.mxu0 0.0
    %843 = vmatpush1.msra.mxu0 %v831
    %844 = vmatprep.subr.mxu0 0.0
    %845 = vmatpush1.msra.mxu0 0.0
    %846 = vmatprep.subr.mxu0 0.0
    %847 = vmatpush1.msra.mxu0 0.0
    %848 = vmatprep.subr.mxu0 0.0
    %849 = vmatpush1.msra.mxu0 0.0
    %850 = vmatprep.subr.mxu0 0.0
    %851 = vmatpush1.msra.mxu0 0.0
    %852 = vmatprep.subr.mxu0 0.0
    %853 = vmatpush1.msra.mxu0 0.0
    %854 = vmatprep.subr.mxu0 0.0
    %855 = vmatpush1.msra.mxu0 0.0
    %856 = vmatprep.subr.mxu0 0.0
    %857 = vmatpush1.msra.mxu0 0.0
    %858 = vmatprep.subr.mxu0 0.0
    %859 = vmatpush1.msra.mxu0 0.0
    %860 = vmatprep.subr.mxu0 0.0
    %861 = vmatpush1.msra.mxu0 0.0
    %862 = vmatprep.subr.mxu0 0.0
    %863 = vmatpush1.msra.mxu0 0.0
    %864 = vmatprep.subr.mxu0 0.0
    %865 = vmatpush1.msra.mxu0 0.0
    %866 = vmatprep.subr.mxu0 0.0
    %867 = vmatpush1.msra.mxu0 0.0
    %868 = vmatprep.subr.mxu0 0.0
    %869 = vmatpush1.msra.mxu0 0.0
    %870 = vmatprep.subr.mxu0 0.0
    %871 = vmatpush1.msra.mxu0 0.0
    %872 = vmatprep.subr.mxu0 0.0
    %873 = vmatpush1.msra.mxu0 0.0
    %874 = vmatprep.subr.mxu0 0.0
    %875 = vmatpush1.msra.mxu0 0.0
    %876 = vmatprep.subr.mxu0 0.0
    %877 = vmatpush1.msra.mxu0 0.0
    %878 = vmatprep.subr.mxu0 0.0
    %879 = vmatpush1.msra.mxu0 0.0
    %880 = vmatprep.subr.mxu0 0.0
    %881 = vmatpush1.msra.mxu0 0.0
    %882 = vmatprep.subr.mxu0 0.0
    %883 = vmatpush1.msra.mxu0 0.0
    %884 = vmatprep.subr.mxu0 0.0
    %885 = vmatpush1.msra.mxu0 0.0
    %886 = vmatprep.subr.mxu0 0.0
    %887 = vmatpush1.msra.mxu0 0.0
    %888 = vmatprep.subr.mxu0 0.0
    %889 = vmatpush1.msra.mxu0 0.0
    %890 = vmatprep.subr.mxu0 0.0
    %891 = vmatpush1.msra.mxu0 0.0
    %892 = vmatprep.subr.mxu0 0.0
    %893 = vmatpush1.msra.mxu0 0.0
    %894 = vmatprep.subr.mxu0 0.0
    %895 = vmatpush1.msra.mxu0 0.0
    %896 = vmatprep.subr.mxu0 0.0
    %897 = vmatpush1.msra.mxu0 0.0
    %898 = vmatprep.subr.mxu0 0.0
    %899 = vmatpush1.msra.mxu0 0.0
    %900 = vmatprep.subr.mxu0 0.0
    %901 = vmatpush1.msra.mxu0 0.0
    %902 = vmatprep.subr.mxu0 0.0
    %903 = vmatpush1.msra.mxu0 0.0
    %904 = vmatprep.mubr.f32.mxu0 0.0
    %905 = vmatmul.mubr.f32.gmra.mrb[0].mxu0 %v835
    %v906 = vpop.f32.mrb[0].mxu0
    %v907 = vadd.f32 0.0, %v906
    %v908 = vpop.f32.mrb[0].mxu0
    %909 = vmatprep.mubr.f32.mxu0 0.0
    %910 = vmatmul.mubr.f32.gmra.mrb[0].mxu0 %v838
    %v911 = vpop.f32.mrb[0].mxu0
    %v912 = vadd.f32 0.0, %v911
    %v913 = vpop.f32.mrb[0].mxu0
    %914 = vdwg.mxu0
    %v915 = vsub.f32 %v826, %v907
    %v916 = vsub.f32 %v827, %v912
    %vm917 = vcmp.gt.f32.partialorder %v915, 0.0
    %vm918 = vcmp.gt.f32.partialorder %v916, 0.0
    %v919 = vsel %vm917, 0.000625, 0.0
    %v920 = vsel %vm918, 0.000625, 0.0
    %v921 = vadd.f32 %v832, %v919
    %v922 = vadd.f32 %v833, %v920
    %923 = vmatprep.subr.mxu0 0.0
    %924 = vmatpush1.msra.mxu0 %v919
    %925 = vmatprep.subr.mxu0 0.0
    %926 = vmatpush1.msra.mxu0 %v920
    %927 = vmatprep.subr.mxu0 0.0
    %928 = vmatpush1.msra.mxu0 0.0
    %929 = vmatprep.subr.mxu0 0.0
    %930 = vmatpush1.msra.mxu0 0.0
    %931 = vmatprep.subr.mxu0 0.0
    %932 = vmatpush1.msra.mxu0 0.0
    %933 = vmatprep.subr.mxu0 0.0
    %934 = vmatpush1.msra.mxu0 0.0
    %935 = vmatprep.subr.mxu0 0.0
    %936 = vmatpush1.msra.mxu0 0.0
    %937 = vmatprep.subr.mxu0 0.0
    %938 = vmatpush1.msra.mxu0 0.0
    %939 = vmatprep.subr.mxu0 0.0
    %940 = vmatpush1.msra.mxu0 0.0
    %941 = vmatprep.subr.mxu0 0.0
    %942 = vmatpush1.msra.mxu0 0.0
    %943 = vmatprep.subr.mxu0 0.0
    %944 = vmatpush1.msra.mxu0 0.0
    %945 = vmatprep.subr.mxu0 0.0
    %946 = vmatpush1.msra.mxu0 0.0
    %947 = vmatprep.subr.mxu0 0.0
    %948 = vmatpush1.msra.mxu0 0.0
    %949 = vmatprep.subr.mxu0 0.0
    %950 = vmatpush1.msra.mxu0 0.0
    %951 = vmatprep.subr.mxu0 0.0
    %952 = vmatpush1.msra.mxu0 0.0
    %953 = vmatprep.subr.mxu0 0.0
    %954 = vmatpush1.msra.mxu0 0.0
    %955 = vmatprep.subr.mxu0 0.0
    %956 = vmatpush1.msra.mxu0 0.0
    %957 = vmatprep.subr.mxu0 0.0
    %958 = vmatpush1.msra.mxu0 0.0
    %959 = vmatprep.subr.mxu0 0.0
    %960 = vmatpush1.msra.mxu0 0.0
    %961 = vmatprep.subr.mxu0 0.0
    %962 = vmatpush1.msra.mxu0 0.0
    %963 = vmatprep.subr.mxu0 0.0
    %964 = vmatpush1.msra.mxu0 0.0
    %965 = vmatprep.subr.mxu0 0.0
    %966 = vmatpush1.msra.mxu0 0.0
    %967 = vmatprep.subr.mxu0 0.0
    %968 = vmatpush1.msra.mxu0 0.0
    %969 = vmatprep.subr.mxu0 0.0
    %970 = vmatpush1.msra.mxu0 0.0
    %971 = vmatprep.subr.mxu0 0.0
    %972 = vmatpush1.msra.mxu0 0.0
    %973 = vmatprep.subr.mxu0 0.0
    %974 = vmatpush1.msra.mxu0 0.0
    %975 = vmatprep.subr.mxu0 0.0
    %976 = vmatpush1.msra.mxu0 0.0
    %977 = vmatprep.subr.mxu0 0.0
    %978 = vmatpush1.msra.mxu0 0.0
    %979 = vmatprep.subr.mxu0 0.0
    %980 = vmatpush1.msra.mxu0 0.0
    %981 = vmatprep.subr.mxu0 0.0
    %982 = vmatpush1.msra.mxu0 0.0
    %983 = vmatprep.subr.mxu0 0.0
    %984 = vmatpush1.msra.mxu0 0.0
    %985 = vmatprep.subr.mxu0 0.0
    %986 = vmatpush1.msra.mxu0 0.0
    %987 = vmatprep.mubr.f32.mxu0 0.0
    %988 = vmatmul.mubr.f32.gmra.mrb[0].mxu0 %v835
    %v989 = vpop.f32.mrb[0].mxu0
    %v990 = vadd.f32 0.0, %v989
    %v991 = vpop.f32.mrb[0].mxu0
    %992 = vmatprep.mubr.f32.mxu0 0.0
    %993 = vmatmul.mubr.f32.gmra.mrb[0].mxu0 %v838
    %v994 = vpop.f32.mrb[0].mxu0
    %v995 = vadd.f32 0.0, %v994
    %v996 = vpop.f32.mrb[0].mxu0
    %997 = vdwg.mxu0
    %v998 = vsub.f32 %v915, %v990
    %v999 = vsub.f32 %v916, %v995
    %vm1000 = vcmp.gt.f32.partialorder %v998, 0.0
    %vm1001 = vcmp.gt.f32.partialorder %v999, 0.0
    %v1002 = vsel %vm1000, 6.25e-05, 0.0
    %v1003 = vsel %vm1001, 6.25e-05, 0.0
    %v1004 = vadd.f32 %v921, %v1002
    %v1005 = vadd.f32 %v922, %v1003
    %1006 = vmatprep.subr.mxu0 0.0
    %1007 = vmatpush1.msra.mxu0 %v1002
    %1008 = vmatprep.subr.mxu0 0.0
    %1009 = vmatpush1.msra.mxu0 %v1003
    %1010 = vmatprep.subr.mxu0 0.0
    %1011 = vmatpush1.msra.mxu0 0.0
    %1012 = vmatprep.subr.mxu0 0.0
    %1013 = vmatpush1.msra.mxu0 0.0
    %1014 = vmatprep.subr.mxu0 0.0
    %1015 = vmatpush1.msra.mxu0 0.0
    %1016 = vmatprep.subr.mxu0 0.0
    %1017 = vmatpush1.msra.mxu0 0.0
    %1018 = vmatprep.subr.mxu0 0.0
    %1019 = vmatpush1.msra.mxu0 0.0
    %1020 = vmatprep.subr.mxu0 0.0
    %1021 = vmatpush1.msra.mxu0 0.0
    %1022 = vmatprep.subr.mxu0 0.0
    %1023 = vmatpush1.msra.mxu0 0.0
    %1024 = vmatprep.subr.mxu0 0.0
    %1025 = vmatpush1.msra.mxu0 0.0
    %1026 = vmatprep.subr.mxu0 0.0
    %1027 = vmatpush1.msra.mxu0 0.0
    %1028 = vmatprep.subr.mxu0 0.0
    %1029 = vmatpush1.msra.mxu0 0.0
    %1030 = vmatprep.subr.mxu0 0.0
    %1031 = vmatpush1.msra.mxu0 0.0
    %1032 = vmatprep.subr.mxu0 0.0
    %1033 = vmatpush1.msra.mxu0 0.0
    %1034 = vmatprep.subr.mxu0 0.0
    %1035 = vmatpush1.msra.mxu0 0.0
    %1036 = vmatprep.subr.mxu0 0.0
    %1037 = vmatpush1.msra.mxu0 0.0
    %1038 = vmatprep.subr.mxu0 0.0
    %1039 = vmatpush1.msra.mxu0 0.0
    %1040 = vmatprep.subr.mxu0 0.0
    %1041 = vmatpush1.msra.mxu0 0.0
    %1042 = vmatprep.subr.mxu0 0.0
    %1043 = vmatpush1.msra.mxu0 0.0
    %1044 = vmatprep.subr.mxu0 0.0
    %1045 = vmatpush1.msra.mxu0 0.0
    %1046 = vmatprep.subr.mxu0 0.0
    %1047 = vmatpush1.msra.mxu0 0.0
    %1048 = vmatprep.subr.mxu0 0.0
    %1049 = vmatpush1.msra.mxu0 0.0
    %1050 = vmatprep.subr.mxu0 0.0
    %1051 = vmatpush1.msra.mxu0 0.0
    %1052 = vmatprep.subr.mxu0 0.0
    %1053 = vmatpush1.msra.mxu0 0.0
    %1054 = vmatprep.subr.mxu0 0.0
    %1055 = vmatpush1.msra.mxu0 0.0
    %1056 = vmatprep.subr.mxu0 0.0
    %1057 = vmatpush1.msra.mxu0 0.0
    %1058 = vmatprep.subr.mxu0 0.0
    %1059 = vmatpush1.msra.mxu0 0.0
    %1060 = vmatprep.subr.mxu0 0.0
    %1061 = vmatpush1.msra.mxu0 0.0
    %1062 = vmatprep.subr.mxu0 0.0
    %1063 = vmatpush1.msra.mxu0 0.0
    %1064 = vmatprep.subr.mxu0 0.0
    %1065 = vmatpush1.msra.mxu0 0.0
    %1066 = vmatprep.subr.mxu0 0.0
    %1067 = vmatpush1.msra.mxu0 0.0
    %1068 = vmatprep.subr.mxu0 0.0
    %1069 = vmatpush1.msra.mxu0 0.0
    %1070 = vmatprep.mubr.f32.mxu0 0.0
    %1071 = vmatmul.mubr.f32.gmra.mrb[0].mxu0 %v835
    %v1072 = vpop.f32.mrb[0].mxu0
    %v1073 = vadd.f32 0.0, %v1072
    %v1074 = vpop.f32.mrb[0].mxu0
    %1075 = vmatprep.mubr.f32.mxu0 0.0
    %1076 = vmatmul.mubr.f32.gmra.mrb[0].mxu0 %v838
    %v1077 = vpop.f32.mrb[0].mxu0
    %v1078 = vadd.f32 0.0, %v1077
    %v1079 = vpop.f32.mrb[0].mxu0
    %1080 = vdwg.mxu0
    %v1081 = vsub.f32 %v998, %v1073
    %v1082 = vsub.f32 %v999, %v1078
    %vm1083 = vcmp.gt.f32.partialorder %v1081, 0.0
    %vm1084 = vcmp.gt.f32.partialorder %v1082, 0.0
    %v1085 = vsel %vm1083, 6.25e-06, 0.0
    %v1086 = vsel %vm1084, 6.25e-06, 0.0
    %v1087 = vadd.f32 %v1004, %v1085
    %v1088 = vadd.f32 %v1005, %v1086
    %1089 = vmatprep.subr.mxu0 0.0
    %1090 = vmatpush1.msra.mxu0 %v1085
    %1091 = vmatprep.subr.mxu0 0.0
    %1092 = vmatpush1.msra.mxu0 %v1086
    %1093 = vmatprep.subr.mxu0 0.0
    %1094 = vmatpush1.msra.mxu0 0.0
    %1095 = vmatprep.subr.mxu0 0.0
    %1096 = vmatpush1.msra.mxu0 0.0
    %1097 = vmatprep.subr.mxu0 0.0
    %1098 = vmatpush1.msra.mxu0 0.0
    %1099 = vmatprep.subr.mxu0 0.0
    %1100 = vmatpush1.msra.mxu0 0.0
    %1101 = vmatprep.subr.mxu0 0.0
    %1102 = vmatpush1.msra.mxu0 0.0
    %1103 = vmatprep.subr.mxu0 0.0
    %1104 = vmatpush1.msra.mxu0 0.0
    %1105 = vmatprep.subr.mxu0 0.0
    %1106 = vmatpush1.msra.mxu0 0.0
    %1107 = vmatprep.subr.mxu0 0.0
    %1108 = vmatpush1.msra.mxu0 0.0
    %1109 = vmatprep.subr.mxu0 0.0
    %1110 = vmatpush1.msra.mxu0 0.0
    %1111 = vmatprep.subr.mxu0 0.0
    %1112 = vmatpush1.msra.mxu0 0.0
    %1113 = vmatprep.subr.mxu0 0.0
    %1114 = vmatpush1.msra.mxu0 0.0
    %1115 = vmatprep.subr.mxu0 0.0
    %1116 = vmatpush1.msra.mxu0 0.0
    %1117 = vmatprep.subr.mxu0 0.0
    %1118 = vmatpush1.msra.mxu0 0.0
    %1119 = vmatprep.subr.mxu0 0.0
    %1120 = vmatpush1.msra.mxu0 0.0
    %1121 = vmatprep.subr.mxu0 0.0
    %1122 = vmatpush1.msra.mxu0 0.0
    %1123 = vmatprep.subr.mxu0 0.0
    %1124 = vmatpush1.msra.mxu0 0.0
    %1125 = vmatprep.subr.mxu0 0.0
    %1126 = vmatpush1.msra.mxu0 0.0
    %1127 = vmatprep.subr.mxu0 0.0
    %1128 = vmatpush1.msra.mxu0 0.0
    %1129 = vmatprep.subr.mxu0 0.0
    %1130 = vmatpush1.msra.mxu0 0.0
    %1131 = vmatprep.subr.mxu0 0.0
    %1132 = vmatpush1.msra.mxu0 0.0
    %1133 = vmatprep.subr.mxu0 0.0
    %1134 = vmatpush1.msra.mxu0 0.0
    %1135 = vmatprep.subr.mxu0 0.0
    %1136 = vmatpush1.msra.mxu0 0.0
    %1137 = vmatprep.subr.mxu0 0.0
    %1138 = vmatpush1.msra.mxu0 0.0
    %1139 = vmatprep.subr.mxu0 0.0
    %1140 = vmatpush1.msra.mxu0 0.0
    %1141 = vmatprep.subr.mxu0 0.0
    %1142 = vmatpush1.msra.mxu0 0.0
    %1143 = vmatprep.subr.mxu0 0.0
    %1144 = vmatpush1.msra.mxu0 0.0
    %1145 = vmatprep.subr.mxu0 0.0
    %1146 = vmatpush1.msra.mxu0 0.0
    %1147 = vmatprep.subr.mxu0 0.0
    %1148 = vmatpush1.msra.mxu0 0.0
    %1149 = vmatprep.subr.mxu0 0.0
    %1150 = vmatpush1.msra.mxu0 0.0
    %1151 = vmatprep.subr.mxu0 0.0
    %1152 = vmatpush1.msra.mxu0 0.0
    %1153 = vmatprep.mubr.f32.mxu0 0.0
    %1154 = vmatmul.mubr.f32.gmra.mrb[0].mxu0 %v835
    %v1155 = vpop.f32.mrb[0].mxu0
    %v1156 = vadd.f32 0.0, %v1155
    %v1157 = vpop.f32.mrb[0].mxu0
    %1158 = vmatprep.mubr.f32.mxu0 0.0
    %1159 = vmatmul.mubr.f32.gmra.mrb[0].mxu0 %v838
    %v1160 = vpop.f32.mrb[0].mxu0
    %v1161 = vadd.f32 0.0, %v1160
    %v1162 = vpop.f32.mrb[0].mxu0
    %1163 = vdwg.mxu0
    %v1164 = vsub.f32 %v1081, %v1156
    %v1165 = vsub.f32 %v1082, %v1161
    %vm1166 = vcmp.gt.f32.partialorder %v1164, 0.0
    %vm1167 = vcmp.gt.f32.partialorder %v1165, 0.0
    %v1168 = vsel %vm1166, 6.25e-07, 0.0
    %v1169 = vsel %vm1167, 6.25e-07, 0.0
    %v1170 = vadd.f32 %v1087, %v1168
    %v1171 = vadd.f32 %v1088, %v1169
    %1172 = vmatprep.subr.mxu0 0.0
    %1173 = vmatpush1.msra.mxu0 %v1168
    %1174 = vmatprep.subr.mxu0 0.0
    %1175 = vmatpush1.msra.mxu0 %v1169
    %1176 = vmatprep.subr.mxu0 0.0
    %1177 = vmatpush1.msra.mxu0 0.0
    %1178 = vmatprep.subr.mxu0 0.0
    %1179 = vmatpush1.msra.mxu0 0.0
    %1180 = vmatprep.subr.mxu0 0.0
    %1181 = vmatpush1.msra.mxu0 0.0
    %1182 = vmatprep.subr.mxu0 0.0
    %1183 = vmatpush1.msra.mxu0 0.0
    %1184 = vmatprep.subr.mxu0 0.0
    %1185 = vmatpush1.msra.mxu0 0.0
    %1186 = vmatprep.subr.mxu0 0.0
    %1187 = vmatpush1.msra.mxu0 0.0
    %1188 = vmatprep.subr.mxu0 0.0
    %1189 = vmatpush1.msra.mxu0 0.0
    %1190 = vmatprep.subr.mxu0 0.0
    %1191 = vmatpush1.msra.mxu0 0.0
    %1192 = vmatprep.subr.mxu0 0.0
    %1193 = vmatpush1.msra.mxu0 0.0
    %1194 = vmatprep.subr.mxu0 0.0
    %1195 = vmatpush1.msra.mxu0 0.0
    %1196 = vmatprep.subr.mxu0 0.0
    %1197 = vmatpush1.msra.mxu0 0.0
    %1198 = vmatprep.subr.mxu0 0.0
    %1199 = vmatpush1.msra.mxu0 0.0
    %1200 = vmatprep.subr.mxu0 0.0
    %1201 = vmatpush1.msra.mxu0 0.0
    %1202 = vmatprep.subr.mxu0 0.0
    %1203 = vmatpush1.msra.mxu0 0.0
    %1204 = vmatprep.subr.mxu0 0.0
    %1205 = vmatpush1.msra.mxu0 0.0
    %1206 = vmatprep.subr.mxu0 0.0
    %1207 = vmatpush1.msra.mxu0 0.0
    %1208 = vmatprep.subr.mxu0 0.0
    %1209 = vmatpush1.msra.mxu0 0.0
    %1210 = vmatprep.subr.mxu0 0.0
    %1211 = vmatpush1.msra.mxu0 0.0
    %1212 = vmatprep.subr.mxu0 0.0
    %1213 = vmatpush1.msra.mxu0 0.0
    %1214 = vmatprep.subr.mxu0 0.0
    %1215 = vmatpush1.msra.mxu0 0.0
    %1216 = vmatprep.subr.mxu0 0.0
    %1217 = vmatpush1.msra.mxu0 0.0
    %1218 = vmatprep.subr.mxu0 0.0
    %1219 = vmatpush1.msra.mxu0 0.0
    %1220 = vmatprep.subr.mxu0 0.0
    %1221 = vmatpush1.msra.mxu0 0.0
    %1222 = vmatprep.subr.mxu0 0.0
    %1223 = vmatpush1.msra.mxu0 0.0
    %1224 = vmatprep.subr.mxu0 0.0
    %1225 = vmatpush1.msra.mxu0 0.0
    %1226 = vmatprep.subr.mxu0 0.0
    %1227 = vmatpush1.msra.mxu0 0.0
    %1228 = vmatprep.subr.mxu0 0.0
    %1229 = vmatpush1.msra.mxu0 0.0
    %1230 = vmatprep.subr.mxu0 0.0
    %1231 = vmatpush1.msra.mxu0 0.0
    %1232 = vmatprep.subr.mxu0 0.0
    %1233 = vmatpush1.msra.mxu0 0.0
    %1234 = vmatprep.subr.mxu0 0.0
    %1235 = vmatpush1.msra.mxu0 0.0
    %1236 = vmatprep.mubr.f32.mxu0 0.0
    %1237 = vmatmul.mubr.f32.gmra.mrb[0].mxu0 %v835
    %v1238 = vpop.f32.mrb[0].mxu0
    %v1239 = vadd.f32 0.0, %v1238
    %v1240 = vpop.f32.mrb[0].mxu0
    %1241 = vmatprep.mubr.f32.mxu0 0.0
    %1242 = vmatmul.mubr.f32.gmra.mrb[0].mxu0 %v838
    %v1243 = vpop.f32.mrb[0].mxu0
    %v1244 = vadd.f32 0.0, %v1243
    %v1245 = vpop.f32.mrb[0].mxu0
    %1246 = vdwg.mxu0
    %v1247 = vsub.f32 %v1164, %v1239
    %v1248 = vsub.f32 %v1165, %v1244
    %vm1249 = vcmp.gt.f32.partialorder %v1247, 0.0
    %vm1250 = vcmp.gt.f32.partialorder %v1248, 0.0
    %v1251 = vsel %vm1249, 6.25e-08, 0.0
    %v1252 = vsel %vm1250, 6.25e-08, 0.0
    %v1253 = vadd.f32 %v1170, %v1251
    %v1254 = vadd.f32 %v1171, %v1252
    %1255 = vmatprep.subr.mxu0 0.0
    %1256 = vmatpush1.msra.mxu0 %v1251
    %1257 = vmatprep.subr.mxu0 0.0
    %1258 = vmatpush1.msra.mxu0 %v1252
    %1259 = vmatprep.subr.mxu0 0.0
    %1260 = vmatpush1.msra.mxu0 0.0
    %1261 = vmatprep.subr.mxu0 0.0
    %1262 = vmatpush1.msra.mxu0 0.0
    %1263 = vmatprep.subr.mxu0 0.0
    %1264 = vmatpush1.msra.mxu0 0.0
    %1265 = vmatprep.subr.mxu0 0.0
    %1266 = vmatpush1.msra.mxu0 0.0
    %1267 = vmatprep.subr.mxu0 0.0
    %1268 = vmatpush1.msra.mxu0 0.0
    %1269 = vmatprep.subr.mxu0 0.0
    %1270 = vmatpush1.msra.mxu0 0.0
    %1271 = vmatprep.subr.mxu0 0.0
    %1272 = vmatpush1.msra.mxu0 0.0
    %1273 = vmatprep.subr.mxu0 0.0
    %1274 = vmatpush1.msra.mxu0 0.0
    %1275 = vmatprep.subr.mxu0 0.0
    %1276 = vmatpush1.msra.mxu0 0.0
    %1277 = vmatprep.subr.mxu0 0.0
    %1278 = vmatpush1.msra.mxu0 0.0
    %1279 = vmatprep.subr.mxu0 0.0
    %1280 = vmatpush1.msra.mxu0 0.0
    %1281 = vmatprep.subr.mxu0 0.0
    %1282 = vmatpush1.msra.mxu0 0.0
    %1283 = vmatprep.subr.mxu0 0.0
    %1284 = vmatpush1.msra.mxu0 0.0
    %1285 = vmatprep.subr.mxu0 0.0
    %1286 = vmatpush1.msra.mxu0 0.0
    %1287 = vmatprep.subr.mxu0 0.0
    %1288 = vmatpush1.msra.mxu0 0.0
    %1289 = vmatprep.subr.mxu0 0.0
    %1290 = vmatpush1.msra.mxu0 0.0
    %1291 = vmatprep.subr.mxu0 0.0
    %1292 = vmatpush1.msra.mxu0 0.0
    %1293 = vmatprep.subr.mxu0 0.0
    %1294 = vmatpush1.msra.mxu0 0.0
    %1295 = vmatprep.subr.mxu0 0.0
    %1296 = vmatpush1.msra.mxu0 0.0
    %1297 = vmatprep.subr.mxu0 0.0
    %1298 = vmatpush1.msra.mxu0 0.0
    %1299 = vmatprep.subr.mxu0 0.0
    %1300 = vmatpush1.msra.mxu0 0.0
    %1301 = vmatprep.subr.mxu0 0.0
    %1302 = vmatpush1.msra.mxu0 0.0
    %1303 = vmatprep.subr.mxu0 0.0
    %1304 = vmatpush1.msra.mxu0 0.0
    %1305 = vmatprep.subr.mxu0 0.0
    %1306 = vmatpush1.msra.mxu0 0.0
    %1307 = vmatprep.subr.mxu0 0.0
    %1308 = vmatpush1.msra.mxu0 0.0
    %1309 = vmatprep.subr.mxu0 0.0
    %1310 = vmatpush1.msra.mxu0 0.0
    %1311 = vmatprep.subr.mxu0 0.0
    %1312 = vmatpush1.msra.mxu0 0.0
    %1313 = vmatprep.subr.mxu0 0.0
    %1314 = vmatpush1.msra.mxu0 0.0
    %1315 = vmatprep.subr.mxu0 0.0
    %1316 = vmatpush1.msra.mxu0 0.0
    %1317 = vmatprep.subr.mxu0 0.0
    %1318 = vmatpush1.msra.mxu0 0.0
    %1319 = vmatprep.mubr.f32.mxu0 0.0
    %1320 = vmatmul.mubr.f32.gmra.mrb[0].mxu0 %v835
    %v1321 = vpop.f32.mrb[0].mxu0
    %v1322 = vadd.f32 0.0, %v1321
    %v1323 = vpop.f32.mrb[0].mxu0
    %1324 = vmatprep.mubr.f32.mxu0 0.0
    %1325 = vmatmul.mubr.f32.gmra.mrb[0].mxu0 %v838
    %v1326 = vpop.f32.mrb[0].mxu0
    %v1327 = vadd.f32 0.0, %v1326
    %v1328 = vpop.f32.mrb[0].mxu0
    %1329 = vdwg.mxu0
    %v1330 = vsub.f32 %v1247, %v1322
    %v1331 = vsub.f32 %v1248, %v1327
    %vm1332 = vcmp.gt.f32.partialorder %v1330, 0.0
    %vm1333 = vcmp.gt.f32.partialorder %v1331, 0.0
    %v1334 = vsel %vm1332, 6.25e-09, 0.0
    %v1335 = vsel %vm1333, 6.25e-09, 0.0
    %v1336 = vadd.f32 %v1253, %v1334
    %v1337 = vadd.f32 %v1254, %v1335
    %1338 = vmatprep.subr.mxu0 0.0
    %1339 = vmatpush1.msra.mxu0 %v1334
    %1340 = vmatprep.subr.mxu0 0.0
    %1341 = vmatpush1.msra.mxu0 %v1335
    %1342 = vmatprep.subr.mxu0 0.0
    %1343 = vmatpush1.msra.mxu0 0.0
    %1344 = vmatprep.subr.mxu0 0.0
    %1345 = vmatpush1.msra.mxu0 0.0
    %1346 = vmatprep.subr.mxu0 0.0
    %1347 = vmatpush1.msra.mxu0 0.0
    %1348 = vmatprep.subr.mxu0 0.0
    %1349 = vmatpush1.msra.mxu0 0.0
    %1350 = vmatprep.subr.mxu0 0.0
    %1351 = vmatpush1.msra.mxu0 0.0
    %1352 = vmatprep.subr.mxu0 0.0
    %1353 = vmatpush1.msra.mxu0 0.0
    %1354 = vmatprep.subr.mxu0 0.0
    %1355 = vmatpush1.msra.mxu0 0.0
    %1356 = vmatprep.subr.mxu0 0.0
    %1357 = vmatpush1.msra.mxu0 0.0
    %1358 = vmatprep.subr.mxu0 0.0
    %1359 = vmatpush1.msra.mxu0 0.0
    %1360 = vmatprep.subr.mxu0 0.0
    %1361 = vmatpush1.msra.mxu0 0.0
    %1362 = vmatprep.subr.mxu0 0.0
    %1363 = vmatpush1.msra.mxu0 0.0
    %1364 = vmatprep.subr.mxu0 0.0
    %1365 = vmatpush1.msra.mxu0 0.0
    %1366 = vmatprep.subr.mxu0 0.0
    %1367 = vmatpush1.msra.mxu0 0.0
    %1368 = vmatprep.subr.mxu0 0.0
    %1369 = vmatpush1.msra.mxu0 0.0
    %1370 = vmatprep.subr.mxu0 0.0
    %1371 = vmatpush1.msra.mxu0 0.0
    %1372 = vmatprep.subr.mxu0 0.0
    %1373 = vmatpush1.msra.mxu0 0.0
    %1374 = vmatprep.subr.mxu0 0.0
    %1375 = vmatpush1.msra.mxu0 0.0
    %1376 = vmatprep.subr.mxu0 0.0
    %1377 = vmatpush1.msra.mxu0 0.0
    %1378 = vmatprep.subr.mxu0 0.0
    %1379 = vmatpush1.msra.mxu0 0.0
    %1380 = vmatprep.subr.mxu0 0.0
    %1381 = vmatpush1.msra.mxu0 0.0
    %1382 = vmatprep.subr.mxu0 0.0
    %1383 = vmatpush1.msra.mxu0 0.0
    %1384 = vmatprep.subr.mxu0 0.0
    %1385 = vmatpush1.msra.mxu0 0.0
    %1386 = vmatprep.subr.mxu0 0.0
    %1387 = vmatpush1.msra.mxu0 0.0
    %1388 = vmatprep.subr.mxu0 0.0
    %1389 = vmatpush1.msra.mxu0 0.0
    %1390 = vmatprep.subr.mxu0 0.0
    %1391 = vmatpush1.msra.mxu0 0.0
    %1392 = vmatprep.subr.mxu0 0.0
    %1393 = vmatpush1.msra.mxu0 0.0
    %1394 = vmatprep.subr.mxu0 0.0
    %1395 = vmatpush1.msra.mxu0 0.0
    %1396 = vmatprep.subr.mxu0 0.0
    %1397 = vmatpush1.msra.mxu0 0.0
    %1398 = vmatprep.subr.mxu0 0.0
    %1399 = vmatpush1.msra.mxu0 0.0
    %1400 = vmatprep.subr.mxu0 0.0
    %1401 = vmatpush1.msra.mxu0 0.0
    %1402 = vmatprep.mubr.f32.mxu0 0.0
    %1403 = vmatmul.mubr.f32.gmra.mrb[0].mxu0 %v835
    %v1404 = vpop.f32.mrb[0].mxu0
    %v1405 = vadd.f32 0.0, %v1404
    %v1406 = vpop.f32.mrb[0].mxu0
    %1407 = vmatprep.mubr.f32.mxu0 0.0
    %1408 = vmatmul.mubr.f32.gmra.mrb[0].mxu0 %v838
    %v1409 = vpop.f32.mrb[0].mxu0
    %v1410 = vadd.f32 0.0, %v1409
    %v1411 = vpop.f32.mrb[0].mxu0
    %1412 = vdwg.mxu0
    %v1413 = vsub.f32 %v1330, %v1405
    %v1414 = vsub.f32 %v1331, %v1410
    %vm1415 = vcmp.gt.f32.partialorder %v1413, 0.0
    %vm1416 = vcmp.gt.f32.partialorder %v1414, 0.0
    %v1417 = vsel %vm1415, 6.25e-10, 0.0
    %v1418 = vsel %vm1416, 6.25e-10, 0.0
    %v1419 = vadd.f32 %v1336, %v1417
    %v1420 = vadd.f32 %v1337, %v1418
    %1421 = vmatprep.subr.mxu0 0.0
    %1422 = vmatpush1.msra.mxu0 %v1417
    %1423 = vmatprep.subr.mxu0 0.0
    %1424 = vmatpush1.msra.mxu0 %v1418
    %1425 = vmatprep.subr.mxu0 0.0
    %1426 = vmatpush1.msra.mxu0 0.0
    %1427 = vmatprep.subr.mxu0 0.0
    %1428 = vmatpush1.msra.mxu0 0.0
    %1429 = vmatprep.subr.mxu0 0.0
    %1430 = vmatpush1.msra.mxu0 0.0
    %1431 = vmatprep.subr.mxu0 0.0
    %1432 = vmatpush1.msra.mxu0 0.0
    %1433 = vmatprep.subr.mxu0 0.0
    %1434 = vmatpush1.msra.mxu0 0.0
    %1435 = vmatprep.subr.mxu0 0.0
    %1436 = vmatpush1.msra.mxu0 0.0
    %1437 = vmatprep.subr.mxu0 0.0
    %1438 = vmatpush1.msra.mxu0 0.0
    %1439 = vmatprep.subr.mxu0 0.0
    %1440 = vmatpush1.msra.mxu0 0.0
    %1441 = vmatprep.subr.mxu0 0.0
    %1442 = vmatpush1.msra.mxu0 0.0
    %1443 = vmatprep.subr.mxu0 0.0
    %1444 = vmatpush1.msra.mxu0 0.0
    %1445 = vmatprep.subr.mxu0 0.0
    %1446 = vmatpush1.msra.mxu0 0.0
    %1447 = vmatprep.subr.mxu0 0.0
    %1448 = vmatpush1.msra.mxu0 0.0
    %1449 = vmatprep.subr.mxu0 0.0
    %1450 = vmatpush1.msra.mxu0 0.0
    %1451 = vmatprep.subr.mxu0 0.0
    %1452 = vmatpush1.msra.mxu0 0.0
    %1453 = vmatprep.subr.mxu0 0.0
    %1454 = vmatpush1.msra.mxu0 0.0
    %1455 = vmatprep.subr.mxu0 0.0
    %1456 = vmatpush1.msra.mxu0 0.0
    %1457 = vmatprep.subr.mxu0 0.0
    %1458 = vmatpush1.msra.mxu0 0.0
    %1459 = vmatprep.subr.mxu0 0.0
    %1460 = vmatpush1.msra.mxu0 0.0
    %1461 = vmatprep.subr.mxu0 0.0
    %1462 = vmatpush1.msra.mxu0 0.0
    %1463 = vmatprep.subr.mxu0 0.0
    %1464 = vmatpush1.msra.mxu0 0.0
    %1465 = vmatprep.subr.mxu0 0.0
    %1466 = vmatpush1.msra.mxu0 0.0
    %1467 = vmatprep.subr.mxu0 0.0
    %1468 = vmatpush1.msra.mxu0 0.0
    %1469 = vmatprep.subr.mxu0 0.0
    %1470 = vmatpush1.msra.mxu0 0.0
    %1471 = vmatprep.subr.mxu0 0.0
    %1472 = vmatpush1.msra.mxu0 0.0
    %1473 = vmatprep.subr.mxu0 0.0
    %1474 = vmatpush1.msra.mxu0 0.0
    %1475 = vmatprep.subr.mxu0 0.0
    %1476 = vmatpush1.msra.mxu0 0.0
    %1477 = vmatprep.subr.mxu0 0.0
    %1478 = vmatpush1.msra.mxu0 0.0
    %1479 = vmatprep.subr.mxu0 0.0
    %1480 = vmatpush1.msra.mxu0 0.0
    %1481 = vmatprep.subr.mxu0 0.0
    %1482 = vmatpush1.msra.mxu0 0.0
    %1483 = vmatprep.subr.mxu0 0.0
    %1484 = vmatpush1.msra.mxu0 0.0
    %1485 = vmatprep.mubr.f32.mxu0 0.0
    %1486 = vmatmul.mubr.f32.gmra.mrb[0].mxu0 %v835
    %v1487 = vpop.f32.mrb[0].mxu0
    %v1488 = vadd.f32 0.0, %v1487
    %v1489 = vpop.f32.mrb[0].mxu0
    %1490 = vmatprep.mubr.f32.mxu0 0.0
    %1491 = vmatmul.mubr.f32.gmra.mrb[0].mxu0 %v838
    %v1492 = vpop.f32.mrb[0].mxu0
    %v1493 = vadd.f32 0.0, %v1492
    %v1494 = vpop.f32.mrb[0].mxu0
    %1495 = vdwg.mxu0
    %v1496 = vsub.f32 %v1413, %v1488
    %v1497 = vsub.f32 %v1414, %v1493
    %vm1498 = vcmp.gt.f32.partialorder %v1496, 0.0
    %vm1499 = vcmp.gt.f32.partialorder %v1497, 0.0
    %v1500 = vsel %vm1498, 6.25e-11, 0.0
    %v1501 = vsel %vm1499, 6.25e-11, 0.0
    %v1502 = vadd.f32 %v1419, %v1500
    %v1503 = vadd.f32 %v1420, %v1501
    %1504 = vmatprep.subr.mxu0 0.0
    %1505 = vmatpush1.msra.mxu0 %v1500
    %1506 = vmatprep.subr.mxu0 0.0
    %1507 = vmatpush1.msra.mxu0 %v1501
    %1508 = vmatprep.subr.mxu0 0.0
    %1509 = vmatpush1.msra.mxu0 0.0
    %1510 = vmatprep.subr.mxu0 0.0
    %1511 = vmatpush1.msra.mxu0 0.0
    %1512 = vmatprep.subr.mxu0 0.0
    %1513 = vmatpush1.msra.mxu0 0.0
    %1514 = vmatprep.subr.mxu0 0.0
    %1515 = vmatpush1.msra.mxu0 0.0
    %1516 = vmatprep.subr.mxu0 0.0
    %1517 = vmatpush1.msra.mxu0 0.0
    %1518 = vmatprep.subr.mxu0 0.0
    %1519 = vmatpush1.msra.mxu0 0.0
    %1520 = vmatprep.subr.mxu0 0.0
    %1521 = vmatpush1.msra.mxu0 0.0
    %1522 = vmatprep.subr.mxu0 0.0
    %1523 = vmatpush1.msra.mxu0 0.0
    %1524 = vmatprep.subr.mxu0 0.0
    %1525 = vmatpush1.msra.mxu0 0.0
    %1526 = vmatprep.subr.mxu0 0.0
    %1527 = vmatpush1.msra.mxu0 0.0
    %1528 = vmatprep.subr.mxu0 0.0
    %1529 = vmatpush1.msra.mxu0 0.0
    %1530 = vmatprep.subr.mxu0 0.0
    %1531 = vmatpush1.msra.mxu0 0.0
    %1532 = vmatprep.subr.mxu0 0.0
    %1533 = vmatpush1.msra.mxu0 0.0
    %1534 = vmatprep.subr.mxu0 0.0
    %1535 = vmatpush1.msra.mxu0 0.0
    %1536 = vmatprep.subr.mxu0 0.0
    %1537 = vmatpush1.msra.mxu0 0.0
    %1538 = vmatprep.subr.mxu0 0.0
    %1539 = vmatpush1.msra.mxu0 0.0
    %1540 = vmatprep.subr.mxu0 0.0
    %1541 = vmatpush1.msra.mxu0 0.0
    %1542 = vmatprep.subr.mxu0 0.0
    %1543 = vmatpush1.msra.mxu0 0.0
    %1544 = vmatprep.subr.mxu0 0.0
    %1545 = vmatpush1.msra.mxu0 0.0
    %1546 = vmatprep.subr.mxu0 0.0
    %1547 = vmatpush1.msra.mxu0 0.0
    %1548 = vmatprep.subr.mxu0 0.0
    %1549 = vmatpush1.msra.mxu0 0.0
    %1550 = vmatprep.subr.mxu0 0.0
    %1551 = vmatpush1.msra.mxu0 0.0
    %1552 = vmatprep.subr.mxu0 0.0
    %1553 = vmatpush1.msra.mxu0 0.0
    %1554 = vmatprep.subr.mxu0 0.0
    %1555 = vmatpush1.msra.mxu0 0.0
    %1556 = vmatprep.subr.mxu0 0.0
    %1557 = vmatpush1.msra.mxu0 0.0
    %1558 = vmatprep.subr.mxu0 0.0
    %1559 = vmatpush1.msra.mxu0 0.0
    %1560 = vmatprep.subr.mxu0 0.0
    %1561 = vmatpush1.msra.mxu0 0.0
    %1562 = vmatprep.subr.mxu0 0.0
    %1563 = vmatpush1.msra.mxu0 0.0
    %1564 = vmatprep.subr.mxu0 0.0
    %1565 = vmatpush1.msra.mxu0 0.0
    %1566 = vmatprep.subr.mxu0 0.0
    %1567 = vmatpush1.msra.mxu0 0.0
    %1568 = vmatprep.mubr.f32.mxu0 0.0
    %1569 = vmatmul.mubr.f32.gmra.mrb[0].mxu0 %v835
    %v1570 = vpop.f32.mrb[0].mxu0
    %v1571 = vadd.f32 0.0, %v1570
    %v1572 = vpop.f32.mrb[0].mxu0
    %1573 = vmatprep.mubr.f32.mxu0 0.0
    %1574 = vmatmul.mubr.f32.gmra.mrb[0].mxu0 %v838
    %v1575 = vpop.f32.mrb[0].mxu0
    %v1576 = vadd.f32 0.0, %v1575
    %v1577 = vpop.f32.mrb[0].mxu0
    %1578 = vdwg.mxu0
    %v1579 = vsub.f32 %v1496, %v1571
    %v1580 = vsub.f32 %v1497, %v1576
    %vm1581 = vcmp.gt.f32.partialorder %v1579, 0.0
    %vm1582 = vcmp.gt.f32.partialorder %v1580, 0.0
    %v1583 = vsel %vm1581, 6.25e-12, 0.0
    %v1584 = vsel %vm1582, 6.25e-12, 0.0
    %v1585 = vadd.f32 %v1502, %v1583
    %v1586 = vadd.f32 %v1503, %v1584
    %v1587 = vld [vmem:[%s3] sm:$0xff]
    %v1588 = vld [vmem:[%s3 + $0x8] sm:$0xff]
    %v1589 = vld [vmem:[%s3 + $0x10] sm:$0xff]
    %v1590 = vld [vmem:[%s3 + $0x18] sm:$0xff]
    %v1592 = vsel %vm280, %v1587, 0
    %v1595 = vsel %vm280, %v1588, 0
    %v1598 = vsel %vm280, %v1589, 0
    %v1601 = vsel %vm280, %v1590, 0
    %1603 = vmatprep.subr.mxu0 0.0
    %1604 = vmatpush1.msra.mxu0 %v1585
    %1605 = vmatprep.subr.mxu0 0.0
    %1606 = vmatpush1.msra.mxu0 %v1586
    %1607 = vmatprep.subr.mxu0 0.0
    %1608 = vmatpush1.msra.mxu0 0.0
    %1609 = vmatprep.subr.mxu0 0.0
    %1610 = vmatpush1.msra.mxu0 0.0
    %1611 = vmatprep.subr.mxu0 0.0
    %1612 = vmatpush1.msra.mxu0 0.0
    %1613 = vmatprep.subr.mxu0 0.0
    %1614 = vmatpush1.msra.mxu0 0.0
    %1615 = vmatprep.subr.mxu0 0.0
    %1616 = vmatpush1.msra.mxu0 0.0
    %1617 = vmatprep.subr.mxu0 0.0
    %1618 = vmatpush1.msra.mxu0 0.0
    %1619 = vmatprep.subr.mxu0 0.0
    %1620 = vmatpush1.msra.mxu0 0.0
    %1621 = vmatprep.subr.mxu0 0.0
    %1622 = vmatpush1.msra.mxu0 0.0
    %1623 = vmatprep.subr.mxu0 0.0
    %1624 = vmatpush1.msra.mxu0 0.0
    %1625 = vmatprep.subr.mxu0 0.0
    %1626 = vmatpush1.msra.mxu0 0.0
    %1627 = vmatprep.subr.mxu0 0.0
    %1628 = vmatpush1.msra.mxu0 0.0
    %1629 = vmatprep.subr.mxu0 0.0
    %1630 = vmatpush1.msra.mxu0 0.0
    %1631 = vmatprep.subr.mxu0 0.0
    %1632 = vmatpush1.msra.mxu0 0.0
    %1633 = vmatprep.subr.mxu0 0.0
    %1634 = vmatpush1.msra.mxu0 0.0
    %1635 = vmatprep.subr.mxu0 0.0
    %1636 = vmatpush1.msra.mxu0 0.0
    %1637 = vmatprep.subr.mxu0 0.0
    %1638 = vmatpush1.msra.mxu0 0.0
    %1639 = vmatprep.subr.mxu0 0.0
    %1640 = vmatpush1.msra.mxu0 0.0
    %1641 = vmatprep.subr.mxu0 0.0
    %1642 = vmatpush1.msra.mxu0 0.0
    %1643 = vmatprep.subr.mxu0 0.0
    %1644 = vmatpush1.msra.mxu0 0.0
    %1645 = vmatprep.subr.mxu0 0.0
    %1646 = vmatpush1.msra.mxu0 0.0
    %1647 = vmatprep.subr.mxu0 0.0
    %1648 = vmatpush1.msra.mxu0 0.0
    %1649 = vmatprep.subr.mxu0 0.0
    %1650 = vmatpush1.msra.mxu0 0.0
    %1651 = vmatprep.subr.mxu0 0.0
    %1652 = vmatpush1.msra.mxu0 0.0
    %1653 = vmatprep.subr.mxu0 0.0
    %1654 = vmatpush1.msra.mxu0 0.0
    %1655 = vmatprep.subr.mxu0 0.0
    %1656 = vmatpush1.msra.mxu0 0.0
    %1657 = vmatprep.subr.mxu0 0.0
    %1658 = vmatpush1.msra.mxu0 0.0
    %1659 = vmatprep.subr.mxu0 0.0
    %1660 = vmatpush1.msra.mxu0 0.0
    %1661 = vmatprep.subr.mxu0 0.0
    %1662 = vmatpush1.msra.mxu0 0.0
    %1663 = vmatprep.subr.mxu0 0.0
    %1664 = vmatpush1.msra.mxu0 0.0
    %1665 = vmatprep.subr.mxu0 0.0
    %1666 = vmatpush1.msra.mxu0 0.0
    %1667 = vmatprep.mubr.f32.mxu0 0.0
    %1668 = vmatmul.mubr.f32.gmra.mrb[0].mxu0 %v1592
    %v1669 = vpop.f32.mrb[0].mxu0
    %v1670 = vadd.f32 0.0, %v1669
    %v1671 = vpop.f32.mrb[0].mxu0
    %1672 = vmatprep.mubr.f32.mxu0 0.0
    %1673 = vmatmul.mubr.f32.gmra.mrb[0].mxu0 %v1595
    %v1674 = vpop.f32.mrb[0].mxu0
    %v1675 = vadd.f32 0.0, %v1674
    %v1676 = vpop.f32.mrb[0].mxu0
    %1677 = vmatprep.mubr.f32.mxu0 0.0
    %1678 = vmatmul.mubr.f32.gmra.mrb[0].mxu0 %v1598
    %v1679 = vpop.f32.mrb[0].mxu0
    %v1680 = vadd.f32 0.0, %v1679
    %v1681 = vpop.f32.mrb[0].mxu0
    %1682 = vmatprep.mubr.f32.mxu0 0.0
    %1683 = vmatmul.mubr.f32.gmra.mrb[0].mxu0 %v1601
    %v1684 = vpop.f32.mrb[0].mxu0
    %v1685 = vadd.f32 0.0, %v1684
    %v1686 = vpop.f32.mrb[0].mxu0
    %1687 = vdwg.mxu0
    %v1688 = vsub.f32 %v745, %v1670
    %v1689 = vsub.f32 %v746, %v1675
    %v1690 = vsub.f32 %v747, %v1680
    %v1691 = vsub.f32 %v748, %v1685
    %1692 = vst [vmem:[#allocation2] sm:$0xff] %v1688
    %1693 = vst [vmem:[#allocation2 + $0x8] sm:$0xff] %v1689
    %1694 = vst [vmem:[#allocation2 + $0x10] sm:$0xff] %v1690
    %1695 = vst [vmem:[#allocation2 + $0x18] sm:$0xff] %v1691
    // Predicated region
    $region46: #{tpu_custom_call.1} parent=1 // pred_check
      _
    $region47: #{tpu_custom_call.1} parent=1 // pred_check_branch
      %1697 = sbr.rel (0) target = $region49
    $region48: #{tpu_custom_call.1} parent=1 // pred_region
      %s1699 = ssub.s32 512, 512
      %1700 = vsyncadd [#allocation3], %s1699
      %s1701 = sshll.u32 [#allocation2], 4
      %s1702 = int_to_ptr.vmem [resolvable:$true] %s1701
      %1707 = dma.vmem_to_hbm [thread:$0]  %s1702, 512, %s11, [#allocation3], 128, 128, 8
    $region49: #{tpu_custom_call.1} parent=1 // pred_fallthru
      _
    // Predicated region
    $region50: #{tpu_custom_call.1} parent=1 // pred_check
      _
    $region51: #{tpu_custom_call.1} parent=1 // pred_check_branch
      %1709 = sbr.rel (0) target = $region53
    $region52: #{tpu_custom_call.1} parent=1 // pred_region
      %1710 = dma.done [#allocation3], 512
    $region53: #{tpu_custom_call.1} parent=1 // pred_fallthru
      _
    %1711 = vsyncpa [#allocation3], 1

</llo_original>
